<compile_context>
chip_gen: v7x
topology: tpu7x:2x2x1
jax: 0.10.0
libtpu: 0.0.40
codegen_flags: <defaults>
</compile_context>

<pallas_src>
import functools
import math

import jax
import jax.numpy as jnp
from jax.experimental import pallas as pl
from jax.experimental.pallas import tpu as pltpu

# Small, forward-consistent hyper-parameters.
D_MODEL = 32   # configs.d_model
D_INNER = 64   # d_inner
DT_RANK = 4    # dt_rank
D_FF = 16      # configs.d_ff == SSM state size n
D_CONV = 4     # configs.mamba_d_conv
BATCH = 2
SEQ_LEN = 8


def _mamba_kernel(x_ref, pos_ref, w_in_ref, conv_w_ref, conv_b_ref, w_x_ref,
                  w_dt_ref, b_dt_ref, rep_ref, a_rep_ref, d_ref, w_out_ref,
                  o_ref, *, batch, seq_len, d_inner, dt_rank, n_state, d_conv):
  f32 = jnp.float32
  B, L, n = batch, seq_len, n_state
  BL = B * L

  x_bl = x_ref[...]                                     # (B*L, d_model), batch on sublanes
  pos = pos_ref[...]                                    # (B*L, 1) position within sequence

  # --------------- fused in_proj: one lane-dense matmul ---------------------
  xr = jnp.dot(x_bl, w_in_ref[...], preferred_element_type=f32)   # (B*L, 2*d_inner)
  xi = xr[:, :d_inner]                                  # (B*L, d_inner)
  res = xr[:, d_inner:]                                 # (B*L, d_inner)

  # -------- causal depthwise conv1d: sublane roll + causal zero mask --------
  # tap j reads x[t - (K-1-j)]; rows whose in-sequence position < shift are the
  # zero left-padding, which also kills any cross-batch bleed of the roll.
  acc = jnp.broadcast_to(conv_b_ref[...], (BL, d_inner))
  for j in range(d_conv):
    shift = d_conv - 1 - j
    w_j = conv_w_ref[j:j + 1, :]                        # (1, d_inner) static Ref slice
    if shift == 0:
      shifted = xi
    else:
      rolled = pltpu.roll(xi, shift, axis=0)            # row t <- row t - shift (wraps)
      shifted = jnp.where(pos >= shift, rolled, 0.0)    # causal zero pad per sequence
    acc = acc + shifted * w_j
  x_c = jax.nn.silu(acc)                                # u of the scan, (B*L, d_inner)

  # --------------- fused x_proj + dt_proj -----------------------------------
  x_dbl = jnp.dot(x_c, w_x_ref[...], preferred_element_type=f32)  # (B*L, dt_rank+2n)
  delta = jax.nn.softplus(
      jnp.dot(x_dbl[:, :dt_rank], w_dt_ref[...], preferred_element_type=f32)
      + b_dt_ref[...])                                  # (B*L, d_inner)
  bc_t = jnp.transpose(x_dbl[:, dt_rank:])              # (2n, B*L): one small transpose
  b_t = bc_t[:n, :]                                     # (n, B*L)
  c_t = bc_t[n:, :]                                     # (n, B*L)

  # --------------- selective scan, lane-dense (n, B*d_inner) state ----------
  # pack batch onto lanes: delta_w[i, b*d_inner + d] = delta[b*L + i, d]
  delta_w = jnp.concatenate([delta[b * L:(b + 1) * L, :] for b in range(B)],
                            axis=1)                     # (L, B*d_inner) = (8, 128)
  # hoisted exp(delta * A): ONE (L*n, B*d_inner) = (128, 128) EUP op.  rep_ref is
  # a static 0/1 matrix repeating each delta row n times (kept 2-D / MXU-friendly).
  delta_rep = jnp.dot(rep_ref[...], delta_w, preferred_element_type=f32)
  delta_a = jnp.exp(delta_rep * a_rep_ref[...])         # (L*n, B*d_inner)

  du = delta * x_c                                      # (B*L, d_inner)
  state = jnp.zeros((n, B * d_inner), f32)              # (16, 128), lane-dense
  y_rows = []
  for i in range(L):                                    # L static -> unrolled, static slices
    da_i = delta_a[i * n:(i + 1) * n, :]                # (n, B*d_inner)
    dbu_i = jnp.concatenate(
        [b_t[:, b * L + i:b * L + i + 1] * du[b * L + i:b * L + i + 1, :]
         for b in range(B)], axis=1)                    # (n, B*d_inner): delta*u*B
    c_i = jnp.concatenate(
        [jnp.broadcast_to(c_t[:, b * L + i:b * L + i + 1], (n, d_inner))
         for b in range(B)], axis=1)                    # (n, B*d_inner)
    state = da_i * state + dbu_i
    y_rows.append(jnp.sum(state * c_i, axis=0, keepdims=True))   # (1, B*d_inner)
  y_w = jnp.concatenate(y_rows, axis=0)                 # (L, B*d_inner)

  # unpack lanes back to (B*L, d_inner) for the epilogue / out_proj
  y = jnp.concatenate([y_w[:, b * d_inner:(b + 1) * d_inner] for b in range(B)],
                      axis=0)                           # (B*L, d_inner)
  y = y + x_c * d_ref[...]                              # + u * D
  y = y * jax.nn.silu(res)

  # --------------- out_proj + lane-dense (B, L*d_model) store ---------------
  out = jnp.dot(y, w_out_ref[...], preferred_element_type=f32)   # (B*L, d_model)
  rows = []
  for b in range(B):
    rows.append(jnp.concatenate(
        [out[b * L + i:b * L + i + 1, :] for i in range(L)], axis=1))  # (1, L*d_model)
  o_ref[...] = jnp.concatenate(rows, axis=0).astype(o_ref.dtype)       # (B, L*d_model)


def mamba_block_pallas(x, params, *, d_inner=D_INNER, dt_rank=DT_RANK,
                       d_ff=D_FF, d_conv=D_CONV):
  b, l, d_model = x.shape
  f32 = jnp.float32
  n = d_ff

  x_bl = x.astype(f32).reshape(b * l, d_model)          # batch folded onto sublanes
  # in-sequence position, passed in so the causal mask needs no in-kernel div/mod
  pos = jnp.tile(jnp.arange(l, dtype=jnp.int32), b)[:, None]        # (b*l, 1)

  w_in = params["w_in"].astype(f32)                     # (2*d_inner, d_model)
  w_x = params["w_x"].astype(f32)                       # (dt_rank + 2n, d_inner)
  conv_w = params["conv_w"][:, 0, :].astype(f32)        # (d_inner, d_conv)
  a_neg = -jnp.exp(params["A_log"].astype(f32))         # host-side -exp(A_log), (d_inner, n)
  a_rep = jnp.tile(a_neg.T, (l, b))                     # (l*n, b*d_inner) = (128, 128)
  rep = jnp.repeat(jnp.eye(l, dtype=f32), n, axis=0)    # (l*n, l) row-replication matrix

  inputs = [
      x_bl,                                             # (B*L, d_model)
      pos,                                              # (B*L, 1)
      w_in.T,                                           # fused in_proj (d_model, 2*d_inner)
      conv_w.T,                                         # (d_conv, d_inner), row j = tap j
      params["conv_b"].astype(f32)[None, :],            # (1, d_inner)
      w_x.T,                                            # fused x_proj (d_inner, dt_rank+2n)
      params["w_dt"].astype(f32).T,                     # (dt_rank, d_inner)
      params["b_dt"].astype(f32)[None, :],              # (1, d_inner)
      rep,                                              # (L*n, L)
      a_rep,                                            # (L*n, B*d_inner)
      params["D"].astype(f32)[None, :],                 # (1, d_inner)
      params["w_out"].astype(f32).T,                    # (d_inner, d_model)
  ]

  kernel = functools.partial(
      _mamba_kernel, batch=b, seq_len=l, d_inner=d_inner, dt_rank=dt_rank,
      n_state=n, d_conv=d_conv)

  vmem = pl.BlockSpec(memory_space=pltpu.MemorySpace.VMEM)
  out = pl.pallas_call(
      kernel,
      out_shape=jax.ShapeDtypeStruct((b, l * d_model), f32),
      in_specs=[vmem] * len(inputs),
      out_specs=vmem,
  )(*inputs)
  return out.reshape(b, l, d_model)


# ------------------------- pure-JAX reference ------------------------------
def mamba_block_reference(x, p, *, d_inner=D_INNER, dt_rank=DT_RANK,
                          d_ff=D_FF, d_conv=D_CONV):
  b, l, _ = x.shape
  xr = jnp.einsum("bld,ed->ble", x, p["w_in"])
  xi, res = xr[..., :d_inner], xr[..., d_inner:]
  w = p["conv_w"][:, 0, :]                              # (d_inner, K)
  xpad = jnp.pad(xi, ((0, 0), (d_conv - 1, 0), (0, 0)))
  conv = jnp.zeros_like(xi)
  for j in range(d_conv):
    conv = conv + xpad[:, j:j + l, :] * w[:, j][None, None, :]
  conv = conv + p["conv_b"][None, None, :]
  xc = jax.nn.silu(conv)
  x_dbl = jnp.einsum("bld,ed->ble", xc, p["w_x"])
  delta_lo = x_dbl[..., :dt_rank]
  B = x_dbl[..., dt_rank:dt_rank + d_ff]
  C = x_dbl[..., dt_rank + d_ff:]
  delta = jax.nn.softplus(
      jnp.einsum("blr,dr->bld", delta_lo, p["w_dt"]) + p["b_dt"][None, None, :])
  A = -jnp.exp(p["A_log"])
  deltaA = jnp.exp(jnp.einsum("bld,dn->bldn", delta, A))
  deltaBu = jnp.einsum("bld,bln,bld->bldn", delta, B, xc)

  def step(state, inp):
    dA_i, dBu_i, C_i = inp
    state = dA_i * state + dBu_i
    y_i = jnp.einsum("bdn,bn->bd", state, C_i)
    return state, y_i

  state0 = jnp.zeros((b, d_inner, d_ff), x.dtype)
  _, ys = jax.lax.scan(step, state0,
                       (jnp.swapaxes(deltaA, 0, 1),
                        jnp.swapaxes(deltaBu, 0, 1),
                        jnp.swapaxes(C, 0, 1)))
  y = jnp.swapaxes(ys, 0, 1)
  y = y + xc * p["D"][None, None, :]
  y = y * jax.nn.silu(res)
  return jnp.einsum("bld,ed->ble", y, p["w_out"])


def init_params(key):
  ks = jax.random.split(key, 7)

  def uniform(k, shape, bound):
    return jax.random.uniform(k, shape, jnp.float32, -bound, bound)

  w_in = uniform(ks[0], (2 * D_INNER, D_MODEL), 1.0 / math.sqrt(D_MODEL))
  conv_w = uniform(ks[1], (D_INNER, 1, D_CONV), 1.0 / math.sqrt(D_CONV))
  conv_b = uniform(ks[2], (D_INNER,), 1.0 / math.sqrt(D_CONV))
  w_x = uniform(ks[3], (DT_RANK + 2 * D_FF, D_INNER), 1.0 / math.sqrt(D_INNER))
  w_dt = uniform(ks[4], (D_INNER, DT_RANK), 1.0 / math.sqrt(DT_RANK))
  b_dt = uniform(ks[5], (D_INNER,), 1.0 / math.sqrt(DT_RANK))
  a_log = jnp.log(jnp.broadcast_to(
      jnp.arange(1, D_FF + 1, dtype=jnp.float32), (D_INNER, D_FF)))
  d_param = jnp.ones((D_INNER,), jnp.float32)
  w_out = uniform(ks[6], (D_MODEL, D_INNER), 1.0 / math.sqrt(D_INNER))
  return dict(w_in=w_in, conv_w=conv_w, conv_b=conv_b, w_x=w_x, w_dt=w_dt,
              b_dt=b_dt, A_log=a_log, D=d_param, w_out=w_out)


if __name__ == "__main__":
  key = jax.random.PRNGKey(0)
  k_x, k_p = jax.random.split(key)
  params = init_params(k_p)
  x = jax.random.normal(k_x, (BATCH, SEQ_LEN, D_MODEL), jnp.float32)

  out = jax.block_until_ready(mamba_block_pallas(x, params))
  ref = jax.block_until_ready(mamba_block_reference(x, params))

  assert out.shape == (BATCH, SEQ_LEN, D_MODEL)
  if not bool(jnp.allclose(out, ref, rtol=1e-2, atol=1e-2)):
    raise AssertionError(
        f"mismatch vs reference, max abs err = {float(jnp.max(jnp.abs(out - ref)))}")
  print("KERNEL_OK")
</pallas_src>

<mosaic_0001>
module attributes {stable_mosaic.version = 11 : i64} {
  func.func @_mamba_kernel(%arg0: memref<16x32xf32, #tpu.memory_space<vmem>>, %arg1: memref<16x1xi32, #tpu.memory_space<vmem>>, %arg2: memref<32x128xf32, #tpu.memory_space<vmem>>, %arg3: memref<4x64xf32, #tpu.memory_space<vmem>>, %arg4: memref<1x64xf32, #tpu.memory_space<vmem>>, %arg5: memref<64x36xf32, #tpu.memory_space<vmem>>, %arg6: memref<4x64xf32, #tpu.memory_space<vmem>>, %arg7: memref<1x64xf32, #tpu.memory_space<vmem>>, %arg8: memref<128x8xf32, #tpu.memory_space<vmem>>, %arg9: memref<128x128xf32, #tpu.memory_space<vmem>>, %arg10: memref<1x64xf32, #tpu.memory_space<vmem>>, %arg11: memref<64x32xf32, #tpu.memory_space<vmem>>, %arg12: memref<2x256xf32, #tpu.memory_space<vmem>>) attributes {dimension_semantics = [], scalar_prefetch = 0 : i64, scratch_operands = 0 : i64, tpu.core_type = #tpu.core_type<tc>} {
    %c0 = arith.constant 0 : index
    %c0_0 = arith.constant 0 : index
    %0 = vector.load %arg0[%c0, %c0_0] : memref<16x32xf32, #tpu.memory_space<vmem>>, vector<16x32xf32>
    %c0_1 = arith.constant 0 : index
    %c0_2 = arith.constant 0 : index
    %1 = vector.load %arg1[%c0_1, %c0_2] : memref<16x1xi32, #tpu.memory_space<vmem>>, vector<16x1xi32>
    %c0_3 = arith.constant 0 : index
    %c0_4 = arith.constant 0 : index
    %2 = vector.load %arg2[%c0_3, %c0_4] : memref<32x128xf32, #tpu.memory_space<vmem>>, vector<32x128xf32>
    %cst = arith.constant dense<0.000000e+00> : vector<16x128xf32>
    %3 = tpu.matmul %0, %2, %cst {dimension_numbers = #tpu.dot_dimension_numbers<[1], [0], [0], [1], [0, 0, 1, 1], [], []>} : vector<16x32xf32>, vector<32x128xf32>, vector<16x128xf32> -> vector<16x128xf32>
    %4 = vector.extract_strided_slice %3 {offsets = [0, 0], sizes = [16, 64], strides = [1, 1]} : vector<16x128xf32> to vector<16x64xf32>
    %5 = vector.extract_strided_slice %3 {offsets = [0, 64], sizes = [16, 64], strides = [1, 1]} : vector<16x128xf32> to vector<16x64xf32>
    %c0_5 = arith.constant 0 : index
    %c0_6 = arith.constant 0 : index
    %6 = vector.load %arg4[%c0_5, %c0_6] : memref<1x64xf32, #tpu.memory_space<vmem>>, vector<1x64xf32>
    %7 = vector.shape_cast %6 : vector<1x64xf32> to vector<1x64xf32>
    %8 = vector.broadcast %7 : vector<1x64xf32> to vector<16x64xf32>
    %c0_7 = arith.constant 0 : index
    %c0_8 = arith.constant 0 : index
    %9 = vector.load %arg3[%c0_7, %c0_8] : memref<4x64xf32, #tpu.memory_space<vmem>>, vector<1x64xf32>
    %c3_i32 = arith.constant 3 : i32
    %10 = tpu.dynamic_rotate %4 by %c3_i32 dim 0 : vector<16x64xf32>, i32 -> vector<16x64xf32>
    %c3_i32_9 = arith.constant 3 : i32
    %11 = vector.broadcast %c3_i32_9 : i32 to vector<16x1xi32>
    %12 = arith.cmpi sge, %1, %11 : vector<16x1xi32>
    %cst_10 = arith.constant 0.000000e+00 : f32
    %13 = vector.shape_cast %12 : vector<16x1xi1> to vector<16x1xi1>
    %14 = vector.broadcast %13 : vector<16x1xi1> to vector<16x64xi1>
    %15 = vector.broadcast %cst_10 : f32 to vector<16x64xf32>
    %16 = arith.select %14, %10, %15 : vector<16x64xi1>, vector<16x64xf32>
    %17 = vector.broadcast %9 : vector<1x64xf32> to vector<16x64xf32>
    %18 = arith.mulf %16, %17 : vector<16x64xf32>
    %19 = arith.addf %8, %18 : vector<16x64xf32>
    %c1 = arith.constant 1 : index
    %c0_11 = arith.constant 0 : index
    %20 = vector.load %arg3[%c1, %c0_11] : memref<4x64xf32, #tpu.memory_space<vmem>>, vector<1x64xf32>
    %c2_i32 = arith.constant 2 : i32
    %21 = tpu.dynamic_rotate %4 by %c2_i32 dim 0 : vector<16x64xf32>, i32 -> vector<16x64xf32>
    %c2_i32_12 = arith.constant 2 : i32
    %22 = vector.broadcast %c2_i32_12 : i32 to vector<16x1xi32>
    %23 = arith.cmpi sge, %1, %22 : vector<16x1xi32>
    %cst_13 = arith.constant 0.000000e+00 : f32
    %24 = vector.shape_cast %23 : vector<16x1xi1> to vector<16x1xi1>
    %25 = vector.broadcast %24 : vector<16x1xi1> to vector<16x64xi1>
    %26 = vector.broadcast %cst_13 : f32 to vector<16x64xf32>
    %27 = arith.select %25, %21, %26 : vector<16x64xi1>, vector<16x64xf32>
    %28 = vector.broadcast %20 : vector<1x64xf32> to vector<16x64xf32>
    %29 = arith.mulf %27, %28 : vector<16x64xf32>
    %30 = arith.addf %19, %29 : vector<16x64xf32>
    %c2 = arith.constant 2 : index
    %c0_14 = arith.constant 0 : index
    %31 = vector.load %arg3[%c2, %c0_14] : memref<4x64xf32, #tpu.memory_space<vmem>>, vector<1x64xf32>
    %c1_i32 = arith.constant 1 : i32
    %32 = tpu.dynamic_rotate %4 by %c1_i32 dim 0 : vector<16x64xf32>, i32 -> vector<16x64xf32>
    %c1_i32_15 = arith.constant 1 : i32
    %33 = vector.broadcast %c1_i32_15 : i32 to vector<16x1xi32>
    %34 = arith.cmpi sge, %1, %33 : vector<16x1xi32>
    %cst_16 = arith.constant 0.000000e+00 : f32
    %35 = vector.shape_cast %34 : vector<16x1xi1> to vector<16x1xi1>
    %36 = vector.broadcast %35 : vector<16x1xi1> to vector<16x64xi1>
    %37 = vector.broadcast %cst_16 : f32 to vector<16x64xf32>
    %38 = arith.select %36, %32, %37 : vector<16x64xi1>, vector<16x64xf32>
    %39 = vector.broadcast %31 : vector<1x64xf32> to vector<16x64xf32>
    %40 = arith.mulf %38, %39 : vector<16x64xf32>
    %41 = arith.addf %30, %40 : vector<16x64xf32>
    %c3 = arith.constant 3 : index
    %c0_17 = arith.constant 0 : index
    %42 = vector.load %arg3[%c3, %c0_17] : memref<4x64xf32, #tpu.memory_space<vmem>>, vector<1x64xf32>
    %43 = vector.broadcast %42 : vector<1x64xf32> to vector<16x64xf32>
    %44 = arith.mulf %4, %43 : vector<16x64xf32>
    %45 = arith.addf %41, %44 : vector<16x64xf32>
    %46 = arith.negf %45 : vector<16x64xf32>
    %47 = math.exp %46 : vector<16x64xf32>
    %cst_18 = arith.constant 1.000000e+00 : f32
    %48 = vector.broadcast %cst_18 : f32 to vector<16x64xf32>
    %49 = arith.addf %48, %47 : vector<16x64xf32>
    %50 = arith.divf %48, %49 : vector<16x64xf32>
    %51 = arith.mulf %45, %50 : vector<16x64xf32>
    %c0_19 = arith.constant 0 : index
    %c0_20 = arith.constant 0 : index
    %52 = vector.load %arg5[%c0_19, %c0_20] : memref<64x36xf32, #tpu.memory_space<vmem>>, vector<64x36xf32>
    %cst_21 = arith.constant dense<0.000000e+00> : vector<16x36xf32>
    %53 = tpu.matmul %51, %52, %cst_21 {dimension_numbers = #tpu.dot_dimension_numbers<[1], [0], [0], [1], [0, 0, 1, 1], [], []>} : vector<16x64xf32>, vector<64x36xf32>, vector<16x36xf32> -> vector<16x36xf32>
    %54 = vector.extract_strided_slice %53 {offsets = [0, 0], sizes = [16, 4], strides = [1, 1]} : vector<16x36xf32> to vector<16x4xf32>
    %c0_22 = arith.constant 0 : index
    %c0_23 = arith.constant 0 : index
    %55 = vector.load %arg6[%c0_22, %c0_23] : memref<4x64xf32, #tpu.memory_space<vmem>>, vector<4x64xf32>
    %cst_24 = arith.constant dense<0.000000e+00> : vector<16x64xf32>
    %56 = tpu.matmul %54, %55, %cst_24 {dimension_numbers = #tpu.dot_dimension_numbers<[1], [0], [0], [1], [0, 0, 1, 1], [], []>} : vector<16x4xf32>, vector<4x64xf32>, vector<16x64xf32> -> vector<16x64xf32>
    %c0_25 = arith.constant 0 : index
    %c0_26 = arith.constant 0 : index
    %57 = vector.load %arg7[%c0_25, %c0_26] : memref<1x64xf32, #tpu.memory_space<vmem>>, vector<1x64xf32>
    %58 = vector.broadcast %57 : vector<1x64xf32> to vector<16x64xf32>
    %59 = arith.addf %56, %58 : vector<16x64xf32>
    %cst_27 = arith.constant 0.000000e+00 : f32
    %60 = vector.broadcast %cst_27 : f32 to vector<16x64xf32>
    %61 = arith.maximumf %59, %60 : vector<16x64xf32>
    %62 = vector.broadcast %cst_27 : f32 to vector<16x64xf32>
    %63 = arith.subf %59, %62 : vector<16x64xf32>
    %64 = arith.cmpf one, %63, %63 : vector<16x64xf32>
    %65 = vector.broadcast %cst_27 : f32 to vector<16x64xf32>
    %66 = arith.addf %59, %65 : vector<16x64xf32>
    %67 = math.absf %63 : vector<16x64xf32>
    %cst_28 = arith.constant 0.000000e+00 : f32
    %68 = vector.broadcast %cst_28 : f32 to vector<16x64xf32>
    %69 = arith.subf %68, %67 : vector<16x64xf32>
    %70 = math.exp %69 : vector<16x64xf32>
    %71 = math.log1p %70 : vector<16x64xf32>
    %72 = arith.addf %61, %71 : vector<16x64xf32>
    %73 = arith.select %64, %66, %72 : vector<16x64xi1>, vector<16x64xf32>
    %74 = vector.extract_strided_slice %53 {offsets = [0, 4], sizes = [16, 32], strides = [1, 1]} : vector<16x36xf32> to vector<16x32xf32>
    %75 = tpu.transpose %74, [1, 0] : vector<16x32xf32> -> vector<32x16xf32>
    %76 = vector.extract_strided_slice %75 {offsets = [0, 0], sizes = [16, 16], strides = [1, 1]} : vector<32x16xf32> to vector<16x16xf32>
    %77 = vector.extract_strided_slice %75 {offsets = [16, 0], sizes = [16, 16], strides = [1, 1]} : vector<32x16xf32> to vector<16x16xf32>
    %78 = vector.extract_strided_slice %73 {offsets = [0, 0], sizes = [8, 64], strides = [1, 1]} : vector<16x64xf32> to vector<8x64xf32>
    %79 = vector.extract_strided_slice %73 {offsets = [8, 0], sizes = [8, 64], strides = [1, 1]} : vector<16x64xf32> to vector<8x64xf32>
    %80 = tpu.concatenate %78, %79 in 1 : vector<8x64xf32>, vector<8x64xf32> -> vector<8x128xf32>
    %c0_29 = arith.constant 0 : index
    %c0_30 = arith.constant 0 : index
    %81 = vector.load %arg8[%c0_29, %c0_30] : memref<128x8xf32, #tpu.memory_space<vmem>>, vector<128x8xf32>
    %cst_31 = arith.constant dense<0.000000e+00> : vector<128x128xf32>
    %82 = tpu.matmul %81, %80, %cst_31 {dimension_numbers = #tpu.dot_dimension_numbers<[1], [0], [0], [1], [0, 0, 1, 1], [], []>} : vector<128x8xf32>, vector<8x128xf32>, vector<128x128xf32> -> vector<128x128xf32>
    %c0_32 = arith.constant 0 : index
    %c0_33 = arith.constant 0 : index
    %83 = vector.load %arg9[%c0_32, %c0_33] : memref<128x128xf32, #tpu.memory_space<vmem>>, vector<128x128xf32>
    %84 = arith.mulf %82, %83 : vector<128x128xf32>
    %85 = math.exp %84 : vector<128x128xf32>
    %86 = arith.mulf %73, %51 : vector<16x64xf32>
    %cst_34 = arith.constant 0.000000e+00 : f32
    %87 = vector.broadcast %cst_34 : f32 to vector<16x128xf32>
    %88 = vector.extract_strided_slice %85 {offsets = [0, 0], sizes = [16, 128], strides = [1, 1]} : vector<128x128xf32> to vector<16x128xf32>
    %89 = vector.extract_strided_slice %76 {offsets = [0, 0], sizes = [16, 1], strides = [1, 1]} : vector<16x16xf32> to vector<16x1xf32>
    %90 = vector.extract_strided_slice %86 {offsets = [0, 0], sizes = [1, 64], strides = [1, 1]} : vector<16x64xf32> to vector<1x64xf32>
    %91 = vector.broadcast %89 : vector<16x1xf32> to vector<16x64xf32>
    %92 = vector.broadcast %90 : vector<1x64xf32> to vector<16x64xf32>
    %93 = arith.mulf %91, %92 : vector<16x64xf32>
    %94 = vector.extract_strided_slice %76 {offsets = [0, 8], sizes = [16, 1], strides = [1, 1]} : vector<16x16xf32> to vector<16x1xf32>
    %95 = vector.extract_strided_slice %86 {offsets = [8, 0], sizes = [1, 64], strides = [1, 1]} : vector<16x64xf32> to vector<1x64xf32>
    %96 = vector.broadcast %94 : vector<16x1xf32> to vector<16x64xf32>
    %97 = vector.broadcast %95 : vector<1x64xf32> to vector<16x64xf32>
    %98 = arith.mulf %96, %97 : vector<16x64xf32>
    %99 = tpu.concatenate %93, %98 in 1 : vector<16x64xf32>, vector<16x64xf32> -> vector<16x128xf32>
    %100 = vector.extract_strided_slice %77 {offsets = [0, 0], sizes = [16, 1], strides = [1, 1]} : vector<16x16xf32> to vector<16x1xf32>
    %101 = vector.shape_cast %100 : vector<16x1xf32> to vector<16x1xf32>
    %102 = vector.broadcast %101 : vector<16x1xf32> to vector<16x64xf32>
    %103 = vector.extract_strided_slice %77 {offsets = [0, 8], sizes = [16, 1], strides = [1, 1]} : vector<16x16xf32> to vector<16x1xf32>
    %104 = vector.shape_cast %103 : vector<16x1xf32> to vector<16x1xf32>
    %105 = vector.broadcast %104 : vector<16x1xf32> to vector<16x64xf32>
    %106 = tpu.concatenate %102, %105 in 1 : vector<16x64xf32>, vector<16x64xf32> -> vector<16x128xf32>
    %107 = arith.mulf %88, %87 : vector<16x128xf32>
    %108 = arith.addf %107, %99 : vector<16x128xf32>
    %109 = arith.mulf %108, %106 : vector<16x128xf32>
    %cst_35 = arith.constant dense<0.000000e+00> : vector<128xf32>
    %110 = vector.multi_reduction <add>, %109, %cst_35 [0] : vector<16x128xf32> to vector<128xf32>
    %111 = vector.shape_cast %110 : vector<128xf32> to vector<1x128xf32>
    %112 = vector.extract_strided_slice %85 {offsets = [16, 0], sizes = [16, 128], strides = [1, 1]} : vector<128x128xf32> to vector<16x128xf32>
    %113 = vector.extract_strided_slice %76 {offsets = [0, 1], sizes = [16, 1], strides = [1, 1]} : vector<16x16xf32> to vector<16x1xf32>
    %114 = vector.extract_strided_slice %86 {offsets = [1, 0], sizes = [1, 64], strides = [1, 1]} : vector<16x64xf32> to vector<1x64xf32>
    %115 = vector.broadcast %113 : vector<16x1xf32> to vector<16x64xf32>
    %116 = vector.broadcast %114 : vector<1x64xf32> to vector<16x64xf32>
    %117 = arith.mulf %115, %116 : vector<16x64xf32>
    %118 = vector.extract_strided_slice %76 {offsets = [0, 9], sizes = [16, 1], strides = [1, 1]} : vector<16x16xf32> to vector<16x1xf32>
    %119 = vector.extract_strided_slice %86 {offsets = [9, 0], sizes = [1, 64], strides = [1, 1]} : vector<16x64xf32> to vector<1x64xf32>
    %120 = vector.broadcast %118 : vector<16x1xf32> to vector<16x64xf32>
    %121 = vector.broadcast %119 : vector<1x64xf32> to vector<16x64xf32>
    %122 = arith.mulf %120, %121 : vector<16x64xf32>
    %123 = tpu.concatenate %117, %122 in 1 : vector<16x64xf32>, vector<16x64xf32> -> vector<16x128xf32>
    %124 = vector.extract_strided_slice %77 {offsets = [0, 1], sizes = [16, 1], strides = [1, 1]} : vector<16x16xf32> to vector<16x1xf32>
    %125 = vector.shape_cast %124 : vector<16x1xf32> to vector<16x1xf32>
    %126 = vector.broadcast %125 : vector<16x1xf32> to vector<16x64xf32>
    %127 = vector.extract_strided_slice %77 {offsets = [0, 9], sizes = [16, 1], strides = [1, 1]} : vector<16x16xf32> to vector<16x1xf32>
    %128 = vector.shape_cast %127 : vector<16x1xf32> to vector<16x1xf32>
    %129 = vector.broadcast %128 : vector<16x1xf32> to vector<16x64xf32>
    %130 = tpu.concatenate %126, %129 in 1 : vector<16x64xf32>, vector<16x64xf32> -> vector<16x128xf32>
    %131 = arith.mulf %112, %108 : vector<16x128xf32>
    %132 = arith.addf %131, %123 : vector<16x128xf32>
    %133 = arith.mulf %132, %130 : vector<16x128xf32>
    %cst_36 = arith.constant dense<0.000000e+00> : vector<128xf32>
    %134 = vector.multi_reduction <add>, %133, %cst_36 [0] : vector<16x128xf32> to vector<128xf32>
    %135 = vector.shape_cast %134 : vector<128xf32> to vector<1x128xf32>
    %136 = vector.extract_strided_slice %85 {offsets = [32, 0], sizes = [16, 128], strides = [1, 1]} : vector<128x128xf32> to vector<16x128xf32>
    %137 = vector.extract_strided_slice %76 {offsets = [0, 2], sizes = [16, 1], strides = [1, 1]} : vector<16x16xf32> to vector<16x1xf32>
    %138 = vector.extract_strided_slice %86 {offsets = [2, 0], sizes = [1, 64], strides = [1, 1]} : vector<16x64xf32> to vector<1x64xf32>
    %139 = vector.broadcast %137 : vector<16x1xf32> to vector<16x64xf32>
    %140 = vector.broadcast %138 : vector<1x64xf32> to vector<16x64xf32>
    %141 = arith.mulf %139, %140 : vector<16x64xf32>
    %142 = vector.extract_strided_slice %76 {offsets = [0, 10], sizes = [16, 1], strides = [1, 1]} : vector<16x16xf32> to vector<16x1xf32>
    %143 = vector.extract_strided_slice %86 {offsets = [10, 0], sizes = [1, 64], strides = [1, 1]} : vector<16x64xf32> to vector<1x64xf32>
    %144 = vector.broadcast %142 : vector<16x1xf32> to vector<16x64xf32>
    %145 = vector.broadcast %143 : vector<1x64xf32> to vector<16x64xf32>
    %146 = arith.mulf %144, %145 : vector<16x64xf32>
    %147 = tpu.concatenate %141, %146 in 1 : vector<16x64xf32>, vector<16x64xf32> -> vector<16x128xf32>
    %148 = vector.extract_strided_slice %77 {offsets = [0, 2], sizes = [16, 1], strides = [1, 1]} : vector<16x16xf32> to vector<16x1xf32>
    %149 = vector.shape_cast %148 : vector<16x1xf32> to vector<16x1xf32>
    %150 = vector.broadcast %149 : vector<16x1xf32> to vector<16x64xf32>
    %151 = vector.extract_strided_slice %77 {offsets = [0, 10], sizes = [16, 1], strides = [1, 1]} : vector<16x16xf32> to vector<16x1xf32>
    %152 = vector.shape_cast %151 : vector<16x1xf32> to vector<16x1xf32>
    %153 = vector.broadcast %152 : vector<16x1xf32> to vector<16x64xf32>
    %154 = tpu.concatenate %150, %153 in 1 : vector<16x64xf32>, vector<16x64xf32> -> vector<16x128xf32>
    %155 = arith.mulf %136, %132 : vector<16x128xf32>
    %156 = arith.addf %155, %147 : vector<16x128xf32>
    %157 = arith.mulf %156, %154 : vector<16x128xf32>
    %cst_37 = arith.constant dense<0.000000e+00> : vector<128xf32>
    %158 = vector.multi_reduction <add>, %157, %cst_37 [0] : vector<16x128xf32> to vector<128xf32>
    %159 = vector.shape_cast %158 : vector<128xf32> to vector<1x128xf32>
    %160 = vector.extract_strided_slice %85 {offsets = [48, 0], sizes = [16, 128], strides = [1, 1]} : vector<128x128xf32> to vector<16x128xf32>
    %161 = vector.extract_strided_slice %76 {offsets = [0, 3], sizes = [16, 1], strides = [1, 1]} : vector<16x16xf32> to vector<16x1xf32>
    %162 = vector.extract_strided_slice %86 {offsets = [3, 0], sizes = [1, 64], strides = [1, 1]} : vector<16x64xf32> to vector<1x64xf32>
    %163 = vector.broadcast %161 : vector<16x1xf32> to vector<16x64xf32>
    %164 = vector.broadcast %162 : vector<1x64xf32> to vector<16x64xf32>
    %165 = arith.mulf %163, %164 : vector<16x64xf32>
    %166 = vector.extract_strided_slice %76 {offsets = [0, 11], sizes = [16, 1], strides = [1, 1]} : vector<16x16xf32> to vector<16x1xf32>
    %167 = vector.extract_strided_slice %86 {offsets = [11, 0], sizes = [1, 64], strides = [1, 1]} : vector<16x64xf32> to vector<1x64xf32>
    %168 = vector.broadcast %166 : vector<16x1xf32> to vector<16x64xf32>
    %169 = vector.broadcast %167 : vector<1x64xf32> to vector<16x64xf32>
    %170 = arith.mulf %168, %169 : vector<16x64xf32>
    %171 = tpu.concatenate %165, %170 in 1 : vector<16x64xf32>, vector<16x64xf32> -> vector<16x128xf32>
    %172 = vector.extract_strided_slice %77 {offsets = [0, 3], sizes = [16, 1], strides = [1, 1]} : vector<16x16xf32> to vector<16x1xf32>
    %173 = vector.shape_cast %172 : vector<16x1xf32> to vector<16x1xf32>
    %174 = vector.broadcast %173 : vector<16x1xf32> to vector<16x64xf32>
    %175 = vector.extract_strided_slice %77 {offsets = [0, 11], sizes = [16, 1], strides = [1, 1]} : vector<16x16xf32> to vector<16x1xf32>
    %176 = vector.shape_cast %175 : vector<16x1xf32> to vector<16x1xf32>
    %177 = vector.broadcast %176 : vector<16x1xf32> to vector<16x64xf32>
    %178 = tpu.concatenate %174, %177 in 1 : vector<16x64xf32>, vector<16x64xf32> -> vector<16x128xf32>
    %179 = arith.mulf %160, %156 : vector<16x128xf32>
    %180 = arith.addf %179, %171 : vector<16x128xf32>
    %181 = arith.mulf %180, %178 : vector<16x128xf32>
    %cst_38 = arith.constant dense<0.000000e+00> : vector<128xf32>
    %182 = vector.multi_reduction <add>, %181, %cst_38 [0] : vector<16x128xf32> to vector<128xf32>
    %183 = vector.shape_cast %182 : vector<128xf32> to vector<1x128xf32>
    %184 = vector.extract_strided_slice %85 {offsets = [64, 0], sizes = [16, 128], strides = [1, 1]} : vector<128x128xf32> to vector<16x128xf32>
    %185 = vector.extract_strided_slice %76 {offsets = [0, 4], sizes = [16, 1], strides = [1, 1]} : vector<16x16xf32> to vector<16x1xf32>
    %186 = vector.extract_strided_slice %86 {offsets = [4, 0], sizes = [1, 64], strides = [1, 1]} : vector<16x64xf32> to vector<1x64xf32>
    %187 = vector.broadcast %185 : vector<16x1xf32> to vector<16x64xf32>
    %188 = vector.broadcast %186 : vector<1x64xf32> to vector<16x64xf32>
    %189 = arith.mulf %187, %188 : vector<16x64xf32>
    %190 = vector.extract_strided_slice %76 {offsets = [0, 12], sizes = [16, 1], strides = [1, 1]} : vector<16x16xf32> to vector<16x1xf32>
    %191 = vector.extract_strided_slice %86 {offsets = [12, 0], sizes = [1, 64], strides = [1, 1]} : vector<16x64xf32> to vector<1x64xf32>
    %192 = vector.broadcast %190 : vector<16x1xf32> to vector<16x64xf32>
    %193 = vector.broadcast %191 : vector<1x64xf32> to vector<16x64xf32>
    %194 = arith.mulf %192, %193 : vector<16x64xf32>
    %195 = tpu.concatenate %189, %194 in 1 : vector<16x64xf32>, vector<16x64xf32> -> vector<16x128xf32>
    %196 = vector.extract_strided_slice %77 {offsets = [0, 4], sizes = [16, 1], strides = [1, 1]} : vector<16x16xf32> to vector<16x1xf32>
    %197 = vector.shape_cast %196 : vector<16x1xf32> to vector<16x1xf32>
    %198 = vector.broadcast %197 : vector<16x1xf32> to vector<16x64xf32>
    %199 = vector.extract_strided_slice %77 {offsets = [0, 12], sizes = [16, 1], strides = [1, 1]} : vector<16x16xf32> to vector<16x1xf32>
    %200 = vector.shape_cast %199 : vector<16x1xf32> to vector<16x1xf32>
    %201 = vector.broadcast %200 : vector<16x1xf32> to vector<16x64xf32>
    %202 = tpu.concatenate %198, %201 in 1 : vector<16x64xf32>, vector<16x64xf32> -> vector<16x128xf32>
    %203 = arith.mulf %184, %180 : vector<16x128xf32>
    %204 = arith.addf %203, %195 : vector<16x128xf32>
    %205 = arith.mulf %204, %202 : vector<16x128xf32>
    %cst_39 = arith.constant dense<0.000000e+00> : vector<128xf32>
    %206 = vector.multi_reduction <add>, %205, %cst_39 [0] : vector<16x128xf32> to vector<128xf32>
    %207 = vector.shape_cast %206 : vector<128xf32> to vector<1x128xf32>
    %208 = vector.extract_strided_slice %85 {offsets = [80, 0], sizes = [16, 128], strides = [1, 1]} : vector<128x128xf32> to vector<16x128xf32>
    %209 = vector.extract_strided_slice %76 {offsets = [0, 5], sizes = [16, 1], strides = [1, 1]} : vector<16x16xf32> to vector<16x1xf32>
    %210 = vector.extract_strided_slice %86 {offsets = [5, 0], sizes = [1, 64], strides = [1, 1]} : vector<16x64xf32> to vector<1x64xf32>
    %211 = vector.broadcast %209 : vector<16x1xf32> to vector<16x64xf32>
    %212 = vector.broadcast %210 : vector<1x64xf32> to vector<16x64xf32>
    %213 = arith.mulf %211, %212 : vector<16x64xf32>
    %214 = vector.extract_strided_slice %76 {offsets = [0, 13], sizes = [16, 1], strides = [1, 1]} : vector<16x16xf32> to vector<16x1xf32>
    %215 = vector.extract_strided_slice %86 {offsets = [13, 0], sizes = [1, 64], strides = [1, 1]} : vector<16x64xf32> to vector<1x64xf32>
    %216 = vector.broadcast %214 : vector<16x1xf32> to vector<16x64xf32>
    %217 = vector.broadcast %215 : vector<1x64xf32> to vector<16x64xf32>
    %218 = arith.mulf %216, %217 : vector<16x64xf32>
    %219 = tpu.concatenate %213, %218 in 1 : vector<16x64xf32>, vector<16x64xf32> -> vector<16x128xf32>
    %220 = vector.extract_strided_slice %77 {offsets = [0, 5], sizes = [16, 1], strides = [1, 1]} : vector<16x16xf32> to vector<16x1xf32>
    %221 = vector.shape_cast %220 : vector<16x1xf32> to vector<16x1xf32>
    %222 = vector.broadcast %221 : vector<16x1xf32> to vector<16x64xf32>
    %223 = vector.extract_strided_slice %77 {offsets = [0, 13], sizes = [16, 1], strides = [1, 1]} : vector<16x16xf32> to vector<16x1xf32>
    %224 = vector.shape_cast %223 : vector<16x1xf32> to vector<16x1xf32>
    %225 = vector.broadcast %224 : vector<16x1xf32> to vector<16x64xf32>
    %226 = tpu.concatenate %222, %225 in 1 : vector<16x64xf32>, vector<16x64xf32> -> vector<16x128xf32>
    %227 = arith.mulf %208, %204 : vector<16x128xf32>
    %228 = arith.addf %227, %219 : vector<16x128xf32>
    %229 = arith.mulf %228, %226 : vector<16x128xf32>
    %cst_40 = arith.constant dense<0.000000e+00> : vector<128xf32>
    %230 = vector.multi_reduction <add>, %229, %cst_40 [0] : vector<16x128xf32> to vector<128xf32>
    %231 = vector.shape_cast %230 : vector<128xf32> to vector<1x128xf32>
    %232 = vector.extract_strided_slice %85 {offsets = [96, 0], sizes = [16, 128], strides = [1, 1]} : vector<128x128xf32> to vector<16x128xf32>
    %233 = vector.extract_strided_slice %76 {offsets = [0, 6], sizes = [16, 1], strides = [1, 1]} : vector<16x16xf32> to vector<16x1xf32>
    %234 = vector.extract_strided_slice %86 {offsets = [6, 0], sizes = [1, 64], strides = [1, 1]} : vector<16x64xf32> to vector<1x64xf32>
    %235 = vector.broadcast %233 : vector<16x1xf32> to vector<16x64xf32>
    %236 = vector.broadcast %234 : vector<1x64xf32> to vector<16x64xf32>
    %237 = arith.mulf %235, %236 : vector<16x64xf32>
    %238 = vector.extract_strided_slice %76 {offsets = [0, 14], sizes = [16, 1], strides = [1, 1]} : vector<16x16xf32> to vector<16x1xf32>
    %239 = vector.extract_strided_slice %86 {offsets = [14, 0], sizes = [1, 64], strides = [1, 1]} : vector<16x64xf32> to vector<1x64xf32>
    %240 = vector.broadcast %238 : vector<16x1xf32> to vector<16x64xf32>
    %241 = vector.broadcast %239 : vector<1x64xf32> to vector<16x64xf32>
    %242 = arith.mulf %240, %241 : vector<16x64xf32>
    %243 = tpu.concatenate %237, %242 in 1 : vector<16x64xf32>, vector<16x64xf32> -> vector<16x128xf32>
    %244 = vector.extract_strided_slice %77 {offsets = [0, 6], sizes = [16, 1], strides = [1, 1]} : vector<16x16xf32> to vector<16x1xf32>
    %245 = vector.shape_cast %244 : vector<16x1xf32> to vector<16x1xf32>
    %246 = vector.broadcast %245 : vector<16x1xf32> to vector<16x64xf32>
    %247 = vector.extract_strided_slice %77 {offsets = [0, 14], sizes = [16, 1], strides = [1, 1]} : vector<16x16xf32> to vector<16x1xf32>
    %248 = vector.shape_cast %247 : vector<16x1xf32> to vector<16x1xf32>
    %249 = vector.broadcast %248 : vector<16x1xf32> to vector<16x64xf32>
    %250 = tpu.concatenate %246, %249 in 1 : vector<16x64xf32>, vector<16x64xf32> -> vector<16x128xf32>
    %251 = arith.mulf %232, %228 : vector<16x128xf32>
    %252 = arith.addf %251, %243 : vector<16x128xf32>
    %253 = arith.mulf %252, %250 : vector<16x128xf32>
    %cst_41 = arith.constant dense<0.000000e+00> : vector<128xf32>
    %254 = vector.multi_reduction <add>, %253, %cst_41 [0] : vector<16x128xf32> to vector<128xf32>
    %255 = vector.shape_cast %254 : vector<128xf32> to vector<1x128xf32>
    %256 = vector.extract_strided_slice %85 {offsets = [112, 0], sizes = [16, 128], strides = [1, 1]} : vector<128x128xf32> to vector<16x128xf32>
    %257 = vector.extract_strided_slice %76 {offsets = [0, 7], sizes = [16, 1], strides = [1, 1]} : vector<16x16xf32> to vector<16x1xf32>
    %258 = vector.extract_strided_slice %86 {offsets = [7, 0], sizes = [1, 64], strides = [1, 1]} : vector<16x64xf32> to vector<1x64xf32>
    %259 = vector.broadcast %257 : vector<16x1xf32> to vector<16x64xf32>
    %260 = vector.broadcast %258 : vector<1x64xf32> to vector<16x64xf32>
    %261 = arith.mulf %259, %260 : vector<16x64xf32>
    %262 = vector.extract_strided_slice %76 {offsets = [0, 15], sizes = [16, 1], strides = [1, 1]} : vector<16x16xf32> to vector<16x1xf32>
    %263 = vector.extract_strided_slice %86 {offsets = [15, 0], sizes = [1, 64], strides = [1, 1]} : vector<16x64xf32> to vector<1x64xf32>
    %264 = vector.broadcast %262 : vector<16x1xf32> to vector<16x64xf32>
    %265 = vector.broadcast %263 : vector<1x64xf32> to vector<16x64xf32>
    %266 = arith.mulf %264, %265 : vector<16x64xf32>
    %267 = tpu.concatenate %261, %266 in 1 : vector<16x64xf32>, vector<16x64xf32> -> vector<16x128xf32>
    %268 = vector.extract_strided_slice %77 {offsets = [0, 7], sizes = [16, 1], strides = [1, 1]} : vector<16x16xf32> to vector<16x1xf32>
    %269 = vector.shape_cast %268 : vector<16x1xf32> to vector<16x1xf32>
    %270 = vector.broadcast %269 : vector<16x1xf32> to vector<16x64xf32>
    %271 = vector.extract_strided_slice %77 {offsets = [0, 15], sizes = [16, 1], strides = [1, 1]} : vector<16x16xf32> to vector<16x1xf32>
    %272 = vector.shape_cast %271 : vector<16x1xf32> to vector<16x1xf32>
    %273 = vector.broadcast %272 : vector<16x1xf32> to vector<16x64xf32>
    %274 = tpu.concatenate %270, %273 in 1 : vector<16x64xf32>, vector<16x64xf32> -> vector<16x128xf32>
    %275 = arith.mulf %256, %252 : vector<16x128xf32>
    %276 = arith.addf %275, %267 : vector<16x128xf32>
    %277 = arith.mulf %276, %274 : vector<16x128xf32>
    %cst_42 = arith.constant dense<0.000000e+00> : vector<128xf32>
    %278 = vector.multi_reduction <add>, %277, %cst_42 [0] : vector<16x128xf32> to vector<128xf32>
    %279 = vector.shape_cast %278 : vector<128xf32> to vector<1x128xf32>
    %280 = tpu.concatenate %111, %135, %159, %183, %207, %231, %255, %279 in 0 : vector<1x128xf32>, vector<1x128xf32>, vector<1x128xf32>, vector<1x128xf32>, vector<1x128xf32>, vector<1x128xf32>, vector<1x128xf32>, vector<1x128xf32> -> vector<8x128xf32>
    %281 = vector.extract_strided_slice %280 {offsets = [0, 0], sizes = [8, 64], strides = [1, 1]} : vector<8x128xf32> to vector<8x64xf32>
    %282 = vector.extract_strided_slice %280 {offsets = [0, 64], sizes = [8, 64], strides = [1, 1]} : vector<8x128xf32> to vector<8x64xf32>
    %283 = tpu.concatenate %281, %282 in 0 : vector<8x64xf32>, vector<8x64xf32> -> vector<16x64xf32>
    %c0_43 = arith.constant 0 : index
    %c0_44 = arith.constant 0 : index
    %284 = vector.load %arg10[%c0_43, %c0_44] : memref<1x64xf32, #tpu.memory_space<vmem>>, vector<1x64xf32>
    %285 = vector.broadcast %284 : vector<1x64xf32> to vector<16x64xf32>
    %286 = arith.mulf %51, %285 : vector<16x64xf32>
    %287 = arith.addf %283, %286 : vector<16x64xf32>
    %288 = arith.negf %5 : vector<16x64xf32>
    %289 = math.exp %288 : vector<16x64xf32>
    %cst_45 = arith.constant 1.000000e+00 : f32
    %290 = vector.broadcast %cst_45 : f32 to vector<16x64xf32>
    %291 = arith.addf %290, %289 : vector<16x64xf32>
    %292 = arith.divf %290, %291 : vector<16x64xf32>
    %293 = arith.mulf %5, %292 : vector<16x64xf32>
    %294 = arith.mulf %287, %293 : vector<16x64xf32>
    %c0_46 = arith.constant 0 : index
    %c0_47 = arith.constant 0 : index
    %295 = vector.load %arg11[%c0_46, %c0_47] : memref<64x32xf32, #tpu.memory_space<vmem>>, vector<64x32xf32>
    %cst_48 = arith.constant dense<0.000000e+00> : vector<16x32xf32>
    %296 = tpu.matmul %294, %295, %cst_48 {dimension_numbers = #tpu.dot_dimension_numbers<[1], [0], [0], [1], [0, 0, 1, 1], [], []>} : vector<16x64xf32>, vector<64x32xf32>, vector<16x32xf32> -> vector<16x32xf32>
    %297 = vector.extract_strided_slice %296 {offsets = [0, 0], sizes = [1, 32], strides = [1, 1]} : vector<16x32xf32> to vector<1x32xf32>
    %298 = vector.extract_strided_slice %296 {offsets = [1, 0], sizes = [1, 32], strides = [1, 1]} : vector<16x32xf32> to vector<1x32xf32>
    %299 = vector.extract_strided_slice %296 {offsets = [2, 0], sizes = [1, 32], strides = [1, 1]} : vector<16x32xf32> to vector<1x32xf32>
    %300 = vector.extract_strided_slice %296 {offsets = [3, 0], sizes = [1, 32], strides = [1, 1]} : vector<16x32xf32> to vector<1x32xf32>
    %301 = vector.extract_strided_slice %296 {offsets = [4, 0], sizes = [1, 32], strides = [1, 1]} : vector<16x32xf32> to vector<1x32xf32>
    %302 = vector.extract_strided_slice %296 {offsets = [5, 0], sizes = [1, 32], strides = [1, 1]} : vector<16x32xf32> to vector<1x32xf32>
    %303 = vector.extract_strided_slice %296 {offsets = [6, 0], sizes = [1, 32], strides = [1, 1]} : vector<16x32xf32> to vector<1x32xf32>
    %304 = vector.extract_strided_slice %296 {offsets = [7, 0], sizes = [1, 32], strides = [1, 1]} : vector<16x32xf32> to vector<1x32xf32>
    %305 = tpu.concatenate %297, %298, %299, %300, %301, %302, %303, %304 in 1 : vector<1x32xf32>, vector<1x32xf32>, vector<1x32xf32>, vector<1x32xf32>, vector<1x32xf32>, vector<1x32xf32>, vector<1x32xf32>, vector<1x32xf32> -> vector<1x256xf32>
    %306 = vector.extract_strided_slice %296 {offsets = [8, 0], sizes = [1, 32], strides = [1, 1]} : vector<16x32xf32> to vector<1x32xf32>
    %307 = vector.extract_strided_slice %296 {offsets = [9, 0], sizes = [1, 32], strides = [1, 1]} : vector<16x32xf32> to vector<1x32xf32>
    %308 = vector.extract_strided_slice %296 {offsets = [10, 0], sizes = [1, 32], strides = [1, 1]} : vector<16x32xf32> to vector<1x32xf32>
    %309 = vector.extract_strided_slice %296 {offsets = [11, 0], sizes = [1, 32], strides = [1, 1]} : vector<16x32xf32> to vector<1x32xf32>
    %310 = vector.extract_strided_slice %296 {offsets = [12, 0], sizes = [1, 32], strides = [1, 1]} : vector<16x32xf32> to vector<1x32xf32>
    %311 = vector.extract_strided_slice %296 {offsets = [13, 0], sizes = [1, 32], strides = [1, 1]} : vector<16x32xf32> to vector<1x32xf32>
    %312 = vector.extract_strided_slice %296 {offsets = [14, 0], sizes = [1, 32], strides = [1, 1]} : vector<16x32xf32> to vector<1x32xf32>
    %313 = vector.extract_strided_slice %296 {offsets = [15, 0], sizes = [1, 32], strides = [1, 1]} : vector<16x32xf32> to vector<1x32xf32>
    %314 = tpu.concatenate %306, %307, %308, %309, %310, %311, %312, %313 in 1 : vector<1x32xf32>, vector<1x32xf32>, vector<1x32xf32>, vector<1x32xf32>, vector<1x32xf32>, vector<1x32xf32>, vector<1x32xf32>, vector<1x32xf32> -> vector<1x256xf32>
    %315 = tpu.concatenate %305, %314 in 0 : vector<1x256xf32>, vector<1x256xf32> -> vector<2x256xf32>
    %c0_49 = arith.constant 0 : index
    %c0_50 = arith.constant 0 : index
    %316 = vector.load %arg12[%c0_49, %c0_50] : memref<2x256xf32, #tpu.memory_space<vmem>>, vector<2x256xf32>
    tpu.vector_store %arg12[%c0_49, %c0_50], %315 {strides = array<i32>} : memref<2x256xf32, #tpu.memory_space<vmem>>, vector<2x256xf32>,
    return
  }
}

</mosaic_0001>

<llo_original>
// kernel: tpu_custom_call.1
$region0: #{tpu_custom_call.1}
  #allocation0 [shape = 'u32[]', space=smem, size = 0x4, offset = 0x4, fixed_abs, tag = 'smem constant byte address 0x4 - core index']
  #allocation1 [shape = 'u32[144,128]{1,0:T(1,128)}', space=vmem, size = 0x12000, scoped, tag = 'internal scratch']
  %s0 = inlined_call_operand.vmem [shape: f32[16,32], index: 0, kind: input, shape index: {}]
  %s1 = inlined_call_operand.vmem [shape: s32[16,1], index: 1, kind: input, shape index: {}]
  %s2 = inlined_call_operand.vmem [shape: f32[32,128], index: 2, kind: input, shape index: {}]
  %s3 = inlined_call_operand.vmem [shape: f32[4,64], index: 3, kind: input, shape index: {}]
  %s4 = inlined_call_operand.vmem [shape: f32[1,64], index: 4, kind: input, shape index: {}]
  %s5 = inlined_call_operand.vmem [shape: f32[64,36], index: 5, kind: input, shape index: {}]
  %s6 = inlined_call_operand.vmem [shape: f32[4,64], index: 6, kind: input, shape index: {}]
  %s7 = inlined_call_operand.vmem [shape: f32[1,64], index: 7, kind: input, shape index: {}]
  %s8 = inlined_call_operand.vmem [shape: f32[128,8], index: 8, kind: input, shape index: {}]
  %s9 = inlined_call_operand.vmem [shape: f32[128,128], index: 9, kind: input, shape index: {}]
  %s10 = inlined_call_operand.vmem [shape: f32[1,64], index: 10, kind: input, shape index: {}]
  %s11 = inlined_call_operand.vmem [shape: f32[64,32], index: 11, kind: input, shape index: {}]
  %s12 = inlined_call_operand.hbm [shape: f32[2,256], index: 12, kind: output, shape index: {}]
  %s13 = sld [smem:[#allocation0]]
  $region58: #{tpu_custom_call.1} parent=0
    _
  %s15 = ssub.s32 1, %s13
  %s16 = scalar_select 0, %s15, %s13
  $region1: #{tpu_custom_call.1} parent=0
    #allocation2 [shape = 'u8[2048]{0}', space=vmem, size = 0x800, scoped, tag = 'output window, operand 0, single buffered']
    #allocation3 [shape = 's32[1]{0}', space=sflag, size = 0x4, scoped, tag = 'scoped memory for tpu_custom_call.1']
    %17 = vsyncpa [#allocation3], 0
    // Predicated region
    $region2: #{tpu_custom_call.1} parent=1 // pred_check
      _
    $region3: #{tpu_custom_call.1} parent=1 // pred_check_branch
      %19 = sbr.rel (0) target = $region5
    $region4: #{tpu_custom_call.1} parent=1 // pred_region
      _
    $region5: #{tpu_custom_call.1} parent=1 // pred_fallthru
      _
    // Predicated region
    $region6: #{tpu_custom_call.1} parent=1 // pred_check
      _
    $region7: #{tpu_custom_call.1} parent=1 // pred_check_branch
      %21 = sbr.rel (0) target = $region9
    $region8: #{tpu_custom_call.1} parent=1 // pred_region
      _
    $region9: #{tpu_custom_call.1} parent=1 // pred_fallthru
      _
    // Predicated region
    $region10: #{tpu_custom_call.1} parent=1 // pred_check
      _
    $region11: #{tpu_custom_call.1} parent=1 // pred_check_branch
      %23 = sbr.rel (0) target = $region13
    $region12: #{tpu_custom_call.1} parent=1 // pred_region
      _
    $region13: #{tpu_custom_call.1} parent=1 // pred_fallthru
      _
    // Predicated region
    $region14: #{tpu_custom_call.1} parent=1 // pred_check
      _
    $region15: #{tpu_custom_call.1} parent=1 // pred_check_branch
      %25 = sbr.rel (0) target = $region17
    $region16: #{tpu_custom_call.1} parent=1 // pred_region
      _
    $region17: #{tpu_custom_call.1} parent=1 // pred_fallthru
      _
    // Predicated region
    $region18: #{tpu_custom_call.1} parent=1 // pred_check
      _
    $region19: #{tpu_custom_call.1} parent=1 // pred_check_branch
      %27 = sbr.rel (0) target = $region21
    $region20: #{tpu_custom_call.1} parent=1 // pred_region
      _
    $region21: #{tpu_custom_call.1} parent=1 // pred_fallthru
      _
    // Predicated region
    $region22: #{tpu_custom_call.1} parent=1 // pred_check
      _
    $region23: #{tpu_custom_call.1} parent=1 // pred_check_branch
      %29 = sbr.rel (0) target = $region25
    $region24: #{tpu_custom_call.1} parent=1 // pred_region
      _
    $region25: #{tpu_custom_call.1} parent=1 // pred_fallthru
      _
    // Predicated region
    $region26: #{tpu_custom_call.1} parent=1 // pred_check
      _
    $region27: #{tpu_custom_call.1} parent=1 // pred_check_branch
      %31 = sbr.rel (0) target = $region29
    $region28: #{tpu_custom_call.1} parent=1 // pred_region
      _
    $region29: #{tpu_custom_call.1} parent=1 // pred_fallthru
      _
    // Predicated region
    $region30: #{tpu_custom_call.1} parent=1 // pred_check
      _
    $region31: #{tpu_custom_call.1} parent=1 // pred_check_branch
      %33 = sbr.rel (0) target = $region33
    $region32: #{tpu_custom_call.1} parent=1 // pred_region
      _
    $region33: #{tpu_custom_call.1} parent=1 // pred_fallthru
      _
    // Predicated region
    $region34: #{tpu_custom_call.1} parent=1 // pred_check
      _
    $region35: #{tpu_custom_call.1} parent=1 // pred_check_branch
      %35 = sbr.rel (0) target = $region37
    $region36: #{tpu_custom_call.1} parent=1 // pred_region
      _
    $region37: #{tpu_custom_call.1} parent=1 // pred_fallthru
      _
    // Predicated region
    $region38: #{tpu_custom_call.1} parent=1 // pred_check
      _
    $region39: #{tpu_custom_call.1} parent=1 // pred_check_branch
      %37 = sbr.rel (0) target = $region41
    $region40: #{tpu_custom_call.1} parent=1 // pred_region
      _
    $region41: #{tpu_custom_call.1} parent=1 // pred_fallthru
      _
    // Predicated region
    $region42: #{tpu_custom_call.1} parent=1 // pred_check
      _
    $region43: #{tpu_custom_call.1} parent=1 // pred_check_branch
      %39 = sbr.rel (0) target = $region45
    $region44: #{tpu_custom_call.1} parent=1 // pred_region
      _
    $region45: #{tpu_custom_call.1} parent=1 // pred_fallthru
      _
    // Predicated region
    $region46: #{tpu_custom_call.1} parent=1 // pred_check
      _
    $region47: #{tpu_custom_call.1} parent=1 // pred_check_branch
      %41 = sbr.rel (0) target = $region49
    $region48: #{tpu_custom_call.1} parent=1 // pred_region
      _
    $region49: #{tpu_custom_call.1} parent=1 // pred_fallthru
      _
    %v42 = vld [vmem:[%s0] sm:$0xff]
    %v43 = vld [vmem:[%s0 + $0x8] sm:$0xff]
    %v44 = vld [vmem:[%s1] sm:$0xff]
    %v45 = vld [vmem:[%s1 + $0x8] sm:$0xff]
    %v46 = vld [vmem:[%s2] sm:$0xff]
    %v47 = vld [vmem:[%s2 + $0x8] sm:$0xff]
    %v48 = vld [vmem:[%s2 + $0x10] sm:$0xff]
    %v49 = vld [vmem:[%s2 + $0x18] sm:$0xff]
    %vm50 = vcmask 261120
    %v52 = vsel %vm50, %v42, 0
    %v55 = vsel %vm50, %v43, 0
    %57 = vmatprep.subr.mxu0 0.0
    %58 = vmatpush1.msra.mxu0 %v46
    %59 = vmatprep.subr.mxu0 0.0
    %60 = vmatpush1.msra.mxu0 %v47
    %61 = vmatprep.subr.mxu0 0.0
    %62 = vmatpush1.msra.mxu0 %v48
    %63 = vmatprep.subr.mxu0 0.0
    %64 = vmatpush1.msra.mxu0 %v49
    %65 = vmatprep.subr.mxu0 0.0
    %66 = vmatpush1.msra.mxu0 0.0
    %67 = vmatprep.subr.mxu0 0.0
    %68 = vmatpush1.msra.mxu0 0.0
    %69 = vmatprep.subr.mxu0 0.0
    %70 = vmatpush1.msra.mxu0 0.0
    %71 = vmatprep.subr.mxu0 0.0
    %72 = vmatpush1.msra.mxu0 0.0
    %73 = vmatprep.subr.mxu0 0.0
    %74 = vmatpush1.msra.mxu0 0.0
    %75 = vmatprep.subr.mxu0 0.0
    %76 = vmatpush1.msra.mxu0 0.0
    %77 = vmatprep.subr.mxu0 0.0
    %78 = vmatpush1.msra.mxu0 0.0
    %79 = vmatprep.subr.mxu0 0.0
    %80 = vmatpush1.msra.mxu0 0.0
    %81 = vmatprep.subr.mxu0 0.0
    %82 = vmatpush1.msra.mxu0 0.0
    %83 = vmatprep.subr.mxu0 0.0
    %84 = vmatpush1.msra.mxu0 0.0
    %85 = vmatprep.subr.mxu0 0.0
    %86 = vmatpush1.msra.mxu0 0.0
    %87 = vmatprep.subr.mxu0 0.0
    %88 = vmatpush1.msra.mxu0 0.0
    %89 = vmatprep.subr.mxu0 0.0
    %90 = vmatpush1.msra.mxu0 0.0
    %91 = vmatprep.subr.mxu0 0.0
    %92 = vmatpush1.msra.mxu0 0.0
    %93 = vmatprep.subr.mxu0 0.0
    %94 = vmatpush1.msra.mxu0 0.0
    %95 = vmatprep.subr.mxu0 0.0
    %96 = vmatpush1.msra.mxu0 0.0
    %97 = vmatprep.subr.mxu0 0.0
    %98 = vmatpush1.msra.mxu0 0.0
    %99 = vmatprep.subr.mxu0 0.0
    %100 = vmatpush1.msra.mxu0 0.0
    %101 = vmatprep.subr.mxu0 0.0
    %102 = vmatpush1.msra.mxu0 0.0
    %103 = vmatprep.subr.mxu0 0.0
    %104 = vmatpush1.msra.mxu0 0.0
    %105 = vmatprep.subr.mxu0 0.0
    %106 = vmatpush1.msra.mxu0 0.0
    %107 = vmatprep.subr.mxu0 0.0
    %108 = vmatpush1.msra.mxu0 0.0
    %109 = vmatprep.subr.mxu0 0.0
    %110 = vmatpush1.msra.mxu0 0.0
    %111 = vmatprep.subr.mxu0 0.0
    %112 = vmatpush1.msra.mxu0 0.0
    %113 = vmatprep.subr.mxu0 0.0
    %114 = vmatpush1.msra.mxu0 0.0
    %115 = vmatprep.subr.mxu0 0.0
    %116 = vmatpush1.msra.mxu0 0.0
    %117 = vmatprep.subr.mxu0 0.0
    %118 = vmatpush1.msra.mxu0 0.0
    %119 = vmatprep.subr.mxu0 0.0
    %120 = vmatpush1.msra.mxu0 0.0
    %121 = vmatprep.mubr.f32.mxu0 0.0
    %122 = vmatmul.mubr.f32.gmra.mrb[0].mxu0 %v52
    %v123 = vpop.f32.mrb[0].mxu0
    %v124 = vadd.f32 0.0, %v123
    %v125 = vpop.f32.mrb[0].mxu0
    %126 = vmatprep.mubr.f32.mxu0 0.0
    %127 = vmatmul.mubr.f32.gmra.mrb[0].mxu0 %v55
    %v128 = vpop.f32.mrb[0].mxu0
    %v129 = vadd.f32 0.0, %v128
    %v130 = vpop.f32.mrb[0].mxu0
    %131 = vdwg.mxu0
    %v132 = vld [vmem:[%s4] sm:$0x1]
    %v134 = vlaneseq
    %v135 = vshrl.u32 %v134, 7
    %v136 = vsub.s32 0, %v135
    %v137 = vrot.slane %v132, %v136
    %v139 = vld [vmem:[%s3] sm:$0x1]
    %v140 = vrot.slane %v124, 5
    %v141 = vrot.slane %v129, 5
    %v142 = vlaneseq
    %v143 = vshrl.u32 %v142, 7
    %vm144 = vcmp.lt.s32.totalorder %v143, 3
    %v145 = vsel %vm144, %v140, %v141
    %v146 = vsel %vm144, %v141, %v140
    %vm147 = vcmp.ge.s32.totalorder %v44, 3
    %vm148 = vcmp.ge.s32.totalorder %v45, 3
    %v149 = vsel %vm147, 1, 0
    %v150 = vsel %vm148, 1, 0
    %151 = vset.pattern.permute.xlu0 0
    %152 = vperm.xlu0 %151, %v149
    %v153 = vpop.permute.xlu0 %152
    %154 = vset.pattern.permute.xlu0 0
    %155 = vperm.xlu0 %154, %v150
    %v156 = vpop.permute.xlu0 %155
    %vm157 = vcmp.eq.s32.totalorder %v153, 1
    %vm158 = vcmp.eq.s32.totalorder %v156, 1
    %v159 = vsel %vm157, %v146, 0.0
    %v160 = vsel %vm158, %v145, 0.0
    %v161 = vlaneseq
    %v162 = vshrl.u32 %v161, 7
    %v163 = vsub.s32 0, %v162
    %v164 = vrot.slane %v139, %v163
    %v165 = vmul.f32 %v159, %v164
    %v166 = vmul.f32 %v160, %v164
    %v167 = vadd.f32 %v137, %v165
    %v168 = vadd.f32 %v137, %v166
    %v169 = vld [vmem:[%s3 + $0x1] sm:$0x1]
    %v170 = vrot.slane %v124, 6
    %v171 = vrot.slane %v129, 6
    %vm172 = vcmp.lt.s32.totalorder %v143, 2
    %v173 = vsel %vm172, %v170, %v171
    %v174 = vsel %vm172, %v171, %v170
    %vm175 = vcmp.ge.s32.totalorder %v44, 2
    %vm176 = vcmp.ge.s32.totalorder %v45, 2
    %v177 = vsel %vm175, 1, 0
    %v178 = vsel %vm176, 1, 0
    %179 = vset.pattern.permute.xlu0 0
    %180 = vperm.xlu0 %179, %v177
    %v181 = vpop.permute.xlu0 %180
    %182 = vset.pattern.permute.xlu0 0
    %183 = vperm.xlu0 %182, %v178
    %v184 = vpop.permute.xlu0 %183
    %vm185 = vcmp.eq.s32.totalorder %v181, 1
    %vm186 = vcmp.eq.s32.totalorder %v184, 1
    %v187 = vsel %vm185, %v174, 0.0
    %v188 = vsel %vm186, %v173, 0.0
    %v189 = vlaneseq
    %v190 = vshrl.u32 %v189, 7
    %v191 = vsub.s32 0, %v190
    %v192 = vrot.slane %v169, %v191
    %v193 = vmul.f32 %v187, %v192
    %v194 = vmul.f32 %v188, %v192
    %v195 = vadd.f32 %v167, %v193
    %v196 = vadd.f32 %v168, %v194
    %v197 = vld [vmem:[%s3 + $0x2] sm:$0x1]
    %v198 = vrot.slane %v124, 7
    %v199 = vrot.slane %v129, 7
    %vm200 = vcmp.lt.s32.totalorder %v143, 1
    %v201 = vsel %vm200, %v198, %v199
    %v202 = vsel %vm200, %v199, %v198
    %vm203 = vcmp.ge.s32.totalorder %v44, 1
    %vm204 = vcmp.ge.s32.totalorder %v45, 1
    %v205 = vsel %vm203, 1, 0
    %v206 = vsel %vm204, 1, 0
    %207 = vset.pattern.permute.xlu0 0
    %208 = vperm.xlu0 %207, %v205
    %v209 = vpop.permute.xlu0 %208
    %210 = vset.pattern.permute.xlu0 0
    %211 = vperm.xlu0 %210, %v206
    %v212 = vpop.permute.xlu0 %211
    %vm213 = vcmp.eq.s32.totalorder %v209, 1
    %vm214 = vcmp.eq.s32.totalorder %v212, 1
    %v215 = vsel %vm213, %v202, 0.0
    %v216 = vsel %vm214, %v201, 0.0
    %v217 = vlaneseq
    %v218 = vshrl.u32 %v217, 7
    %v219 = vsub.s32 0, %v218
    %v220 = vrot.slane %v197, %v219
    %v221 = vmul.f32 %v215, %v220
    %v222 = vmul.f32 %v216, %v220
    %v223 = vadd.f32 %v195, %v221
    %v224 = vadd.f32 %v196, %v222
    %v225 = vld [vmem:[%s3 + $0x3] sm:$0x1]
    %v226 = vlaneseq
    %v227 = vshrl.u32 %v226, 7
    %v228 = vsub.s32 0, %v227
    %v229 = vrot.slane %v225, %v228
    %v230 = vmul.f32 %v124, %v229
    %v231 = vmul.f32 %v129, %v229
    %v232 = vadd.f32 %v223, %v230
    %v233 = vadd.f32 %v224, %v231
    %v234 = vxor.u32 %v232, 2147483648
    %v235 = vxor.u32 %v233, 2147483648
    %v236 = vmul.f32 %v234, 1.442695
    %v237 = vpow.pop %v236
    %v238 = vmul.f32 %v235, 1.442695
    %v239 = vpow.pop %v238
    %v240 = vadd.f32 %v237, 1.0
    %v241 = vadd.f32 %v239, 1.0
    %v242 = vrcp.pop %v240
    %v243 = vmul.f32 1.0, %v242
    %v244 = vrcp.pop %v241
    %v245 = vmul.f32 1.0, %v244
    %v246 = vmul.f32 %v232, %v243
    %v247 = vmul.f32 %v233, %v245
    %v248 = vld [vmem:[%s5] sm:$0xff]
    %v249 = vld [vmem:[%s5 + $0x8] sm:$0xff]
    %v250 = vld [vmem:[%s5 + $0x10] sm:$0xff]
    %v251 = vld [vmem:[%s5 + $0x18] sm:$0xff]
    %v252 = vld [vmem:[%s5 + $0x20] sm:$0xff]
    %v253 = vld [vmem:[%s5 + $0x28] sm:$0xff]
    %v254 = vld [vmem:[%s5 + $0x30] sm:$0xff]
    %v255 = vld [vmem:[%s5 + $0x38] sm:$0xff]
    %vm256 = vcmask 523264
    %v258 = vsel %vm256, %v246, 0
    %v261 = vsel %vm256, %v247, 0
    %263 = vmatprep.subr.mxu0 0.0
    %264 = vmatpush1.msra.mxu0 %v248
    %265 = vmatprep.subr.mxu0 0.0
    %266 = vmatpush1.msra.mxu0 %v249
    %267 = vmatprep.subr.mxu0 0.0
    %268 = vmatpush1.msra.mxu0 %v250
    %269 = vmatprep.subr.mxu0 0.0
    %270 = vmatpush1.msra.mxu0 %v251
    %271 = vmatprep.subr.mxu0 0.0
    %272 = vmatpush1.msra.mxu0 %v252
    %273 = vmatprep.subr.mxu0 0.0
    %274 = vmatpush1.msra.mxu0 %v253
    %275 = vmatprep.subr.mxu0 0.0
    %276 = vmatpush1.msra.mxu0 %v254
    %277 = vmatprep.subr.mxu0 0.0
    %278 = vmatpush1.msra.mxu0 %v255
    %279 = vmatprep.subr.mxu0 0.0
    %280 = vmatpush1.msra.mxu0 0.0
    %281 = vmatprep.subr.mxu0 0.0
    %282 = vmatpush1.msra.mxu0 0.0
    %283 = vmatprep.subr.mxu0 0.0
    %284 = vmatpush1.msra.mxu0 0.0
    %285 = vmatprep.subr.mxu0 0.0
    %286 = vmatpush1.msra.mxu0 0.0
    %287 = vmatprep.subr.mxu0 0.0
    %288 = vmatpush1.msra.mxu0 0.0
    %289 = vmatprep.subr.mxu0 0.0
    %290 = vmatpush1.msra.mxu0 0.0
    %291 = vmatprep.subr.mxu0 0.0
    %292 = vmatpush1.msra.mxu0 0.0
    %293 = vmatprep.subr.mxu0 0.0
    %294 = vmatpush1.msra.mxu0 0.0
    %295 = vmatprep.subr.mxu0 0.0
    %296 = vmatpush1.msra.mxu0 0.0
    %297 = vmatprep.subr.mxu0 0.0
    %298 = vmatpush1.msra.mxu0 0.0
    %299 = vmatprep.subr.mxu0 0.0
    %300 = vmatpush1.msra.mxu0 0.0
    %301 = vmatprep.subr.mxu0 0.0
    %302 = vmatpush1.msra.mxu0 0.0
    %303 = vmatprep.subr.mxu0 0.0
    %304 = vmatpush1.msra.mxu0 0.0
    %305 = vmatprep.subr.mxu0 0.0
    %306 = vmatpush1.msra.mxu0 0.0
    %307 = vmatprep.subr.mxu0 0.0
    %308 = vmatpush1.msra.mxu0 0.0
    %309 = vmatprep.subr.mxu0 0.0
    %310 = vmatpush1.msra.mxu0 0.0
    %311 = vmatprep.subr.mxu0 0.0
    %312 = vmatpush1.msra.mxu0 0.0
    %313 = vmatprep.subr.mxu0 0.0
    %314 = vmatpush1.msra.mxu0 0.0
    %315 = vmatprep.subr.mxu0 0.0
    %316 = vmatpush1.msra.mxu0 0.0
    %317 = vmatprep.subr.mxu0 0.0
    %318 = vmatpush1.msra.mxu0 0.0
    %319 = vmatprep.subr.mxu0 0.0
    %320 = vmatpush1.msra.mxu0 0.0
    %321 = vmatprep.subr.mxu0 0.0
    %322 = vmatpush1.msra.mxu0 0.0
    %323 = vmatprep.subr.mxu0 0.0
    %324 = vmatpush1.msra.mxu0 0.0
    %325 = vmatprep.subr.mxu0 0.0
    %326 = vmatpush1.msra.mxu0 0.0
    %327 = vmatprep.mubr.f32.mxu0 0.0
    %328 = vmatmul.mubr.f32.gmra.mrb[0].mxu0 %v258
    %v329 = vpop.f32.mrb[0].mxu0
    %v330 = vadd.f32 0.0, %v329
    %v331 = vpop.f32.mrb[0].mxu0
    %332 = vmatprep.mubr.f32.mxu0 0.0
    %333 = vmatmul.mubr.f32.gmra.mrb[0].mxu0 %v261
    %v334 = vpop.f32.mrb[0].mxu0
    %v335 = vadd.f32 0.0, %v334
    %v336 = vpop.f32.mrb[0].mxu0
    %337 = vdwg.mxu0
    %v338 = vld [vmem:[%s6] sm:$0xf]
    %v339 = vld [vmem:[%s7] sm:$0x1]
    %v341 = vlaneseq
    %v342 = vshrl.u32 %v341, 7
    %v343 = vsub.s32 0, %v342
    %v344 = vrot.slane %v339, %v343
    %vm346 = vcmask 31744
    %v348 = vsel %vm346, %v330, 0
    %v351 = vsel %vm346, %v335, 0
    %vm353 = vcmask 1043456
    %v355 = vsel %vm353, %v338, 0
    %357 = vmatprep.subr.mxu0 0.0
    %358 = vmatpush1.msra.mxu0 %v355
    %359 = vmatprep.subr.mxu0 0.0
    %360 = vmatpush1.msra.mxu0 0.0
    %361 = vmatprep.subr.mxu0 0.0
    %362 = vmatpush1.msra.mxu0 0.0
    %363 = vmatprep.subr.mxu0 0.0
    %364 = vmatpush1.msra.mxu0 0.0
    %365 = vmatprep.subr.mxu0 0.0
    %366 = vmatpush1.msra.mxu0 0.0
    %367 = vmatprep.subr.mxu0 0.0
    %368 = vmatpush1.msra.mxu0 0.0
    %369 = vmatprep.subr.mxu0 0.0
    %370 = vmatpush1.msra.mxu0 0.0
    %371 = vmatprep.subr.mxu0 0.0
    %372 = vmatpush1.msra.mxu0 0.0
    %373 = vmatprep.subr.mxu0 0.0
    %374 = vmatpush1.msra.mxu0 0.0
    %375 = vmatprep.subr.mxu0 0.0
    %376 = vmatpush1.msra.mxu0 0.0
    %377 = vmatprep.subr.mxu0 0.0
    %378 = vmatpush1.msra.mxu0 0.0
    %379 = vmatprep.subr.mxu0 0.0
    %380 = vmatpush1.msra.mxu0 0.0
    %381 = vmatprep.subr.mxu0 0.0
    %382 = vmatpush1.msra.mxu0 0.0
    %383 = vmatprep.subr.mxu0 0.0
    %384 = vmatpush1.msra.mxu0 0.0
    %385 = vmatprep.subr.mxu0 0.0
    %386 = vmatpush1.msra.mxu0 0.0
    %387 = vmatprep.subr.mxu0 0.0
    %388 = vmatpush1.msra.mxu0 0.0
    %389 = vmatprep.subr.mxu0 0.0
    %390 = vmatpush1.msra.mxu0 0.0
    %391 = vmatprep.subr.mxu0 0.0
    %392 = vmatpush1.msra.mxu0 0.0
    %393 = vmatprep.subr.mxu0 0.0
    %394 = vmatpush1.msra.mxu0 0.0
    %395 = vmatprep.subr.mxu0 0.0
    %396 = vmatpush1.msra.mxu0 0.0
    %397 = vmatprep.subr.mxu0 0.0
    %398 = vmatpush1.msra.mxu0 0.0
    %399 = vmatprep.subr.mxu0 0.0
    %400 = vmatpush1.msra.mxu0 0.0
    %401 = vmatprep.subr.mxu0 0.0
    %402 = vmatpush1.msra.mxu0 0.0
    %403 = vmatprep.subr.mxu0 0.0
    %404 = vmatpush1.msra.mxu0 0.0
    %405 = vmatprep.subr.mxu0 0.0
    %406 = vmatpush1.msra.mxu0 0.0
    %407 = vmatprep.subr.mxu0 0.0
    %408 = vmatpush1.msra.mxu0 0.0
    %409 = vmatprep.subr.mxu0 0.0
    %410 = vmatpush1.msra.mxu0 0.0
    %411 = vmatprep.subr.mxu0 0.0
    %412 = vmatpush1.msra.mxu0 0.0
    %413 = vmatprep.subr.mxu0 0.0
    %414 = vmatpush1.msra.mxu0 0.0
    %415 = vmatprep.subr.mxu0 0.0
    %416 = vmatpush1.msra.mxu0 0.0
    %417 = vmatprep.subr.mxu0 0.0
    %418 = vmatpush1.msra.mxu0 0.0
    %419 = vmatprep.subr.mxu0 0.0
    %420 = vmatpush1.msra.mxu0 0.0
    %421 = vmatprep.mubr.f32.mxu0 0.0
    %422 = vmatmul.mubr.f32.gmra.mrb[0].mxu0 %v348
    %v423 = vpop.f32.mrb[0].mxu0
    %v424 = vadd.f32 %v344, %v423
    %v425 = vpop.f32.mrb[0].mxu0
    %426 = vmatprep.mubr.f32.mxu0 0.0
    %427 = vmatmul.mubr.f32.gmra.mrb[0].mxu0 %v351
    %v428 = vpop.f32.mrb[0].mxu0
    %v429 = vadd.f32 %v344, %v428
    %v430 = vpop.f32.mrb[0].mxu0
    %431 = vdwg.mxu0
    %v432 = vmax.f32 %v424, 0.0
    %v433 = vmax.f32 %v429, 0.0
    %vm434 = vcmp.ne.f32.partialorder %v424, %v424
    %vm435 = vcmp.ne.f32.partialorder %v429, %v429
    %v436 = vadd.f32 %v424, 0.0
    %v437 = vadd.f32 %v429, 0.0
    %v438 = vand.u32 2147483647, %v424
    %v439 = vand.u32 2147483647, %v429
    %v440 = vsub.f32 0.0, %v438
    %v441 = vsub.f32 0.0, %v439
    %v442 = vmul.f32 %v440, 1.442695
    %v443 = vpow.pop %v442
    %v444 = vmul.f32 %v441, 1.442695
    %v445 = vpow.pop %v444
    %v446 = vadd.f32 %v443, 1.0
    %v447 = vlog2.pop %v446
    %v448 = vmul.f32 %v447, 0.6931472
    %v449 = vmul.f32 -0.5, %v443
    %v450 = vadd.f32 %v449, 1.0
    %v451 = vmul.f32 %v450, %v443
    %v452 = vand.u32 2147483647, %v443
    %vm453 = vcmp.lt.f32.partialorder %v452, 0.0004427343
    %v454 = vsel %vm453, %v451, %v448
    %v455 = vadd.f32 %v445, 1.0
    %v456 = vlog2.pop %v455
    %v457 = vmul.f32 %v456, 0.6931472
    %v458 = vmul.f32 -0.5, %v445
    %v459 = vadd.f32 %v458, 1.0
    %v460 = vmul.f32 %v459, %v445
    %v461 = vand.u32 2147483647, %v445
    %vm462 = vcmp.lt.f32.partialorder %v461, 0.0004427343
    %v463 = vsel %vm462, %v460, %v457
    %v464 = vadd.f32 %v432, %v454
    %v465 = vadd.f32 %v433, %v463
    %v466 = vsel %vm434, %v436, %v464
    %v467 = vsel %vm435, %v437, %v465
    %468 = vrot.lane.b32.xlu0 %v330, 124
    %v469 = vpop.permute.xlu0 %468
    %470 = vrot.lane.b32.xlu0 %v335, 124
    %v471 = vpop.permute.xlu0 %470
    %474 = vxpose.xlu0.b32.start [1/16] %v469, 128
    %475 = vxpose.xlu0.b32.cont [2/16] %v471, 128
    %476 = vxpose.xlu0.b32.cont [3/16] 0.0, 128
    %477 = vxpose.xlu0.b32.cont [4/16] 0.0, 128
    %478 = vxpose.xlu0.b32.cont [5/16] 0.0, 128
    %479 = vxpose.xlu0.b32.cont [6/16] 0.0, 128
    %480 = vxpose.xlu0.b32.cont [7/16] 0.0, 128
    %481 = vxpose.xlu0.b32.cont [8/16] 0.0, 128
    %482 = vxpose.xlu0.b32.cont [9/16] 0.0, 128
    %483 = vxpose.xlu0.b32.cont [10/16] 0.0, 128
    %484 = vxpose.xlu0.b32.cont [11/16] 0.0, 128
    %485 = vxpose.xlu0.b32.cont [12/16] 0.0, 128
    %486 = vxpose.xlu0.b32.cont [13/16] 0.0, 128
    %487 = vxpose.xlu0.b32.cont [14/16] 0.0, 128
    %488 = vxpose.xlu0.b32.cont [15/16] 0.0, 128
    %489 = vxpose.xlu0.b32.end [16/16] 0.0, 128
    %v490 = vpop.trf.xlu0
    %v491 = vpop.trf.xlu0
    %v492 = vpop.trf.xlu0
    %v493 = vpop.trf.xlu0
    %v494 = vpop.trf.xlu0
    %v495 = vpop.trf.xlu0
    %v496 = vpop.trf.xlu0
    %v497 = vpop.trf.xlu0
    %v498 = vpop.trf.xlu0
    %v499 = vpop.trf.xlu0
    %v500 = vpop.trf.xlu0
    %v501 = vpop.trf.xlu0
    %v502 = vpop.trf.xlu0
    %v503 = vpop.trf.xlu0
    %v504 = vpop.trf.xlu0
    %v505 = vpop.trf.xlu0
    %507 = vrot.lane.b32.xlu0 %v467, 64
    %v508 = vpop.permute.xlu0 %507
    %v510 = vsel %vm256, %v466, %v508
    %v511 = vld [vmem:[%s8] sm:$0xff]
    %v512 = vld [vmem:[%s8 + $0x8] sm:$0xff]
    %v513 = vld [vmem:[%s8 + $0x10] sm:$0xff]
    %v514 = vld [vmem:[%s8 + $0x18] sm:$0xff]
    %v515 = vld [vmem:[%s8 + $0x20] sm:$0xff]
    %v516 = vld [vmem:[%s8 + $0x28] sm:$0xff]
    %v517 = vld [vmem:[%s8 + $0x30] sm:$0xff]
    %v518 = vld [vmem:[%s8 + $0x38] sm:$0xff]
    %v519 = vld [vmem:[%s8 + $0x40] sm:$0xff]
    %v520 = vld [vmem:[%s8 + $0x48] sm:$0xff]
    %v521 = vld [vmem:[%s8 + $0x50] sm:$0xff]
    %v522 = vld [vmem:[%s8 + $0x58] sm:$0xff]
    %v523 = vld [vmem:[%s8 + $0x60] sm:$0xff]
    %v524 = vld [vmem:[%s8 + $0x68] sm:$0xff]
    %v525 = vld [vmem:[%s8 + $0x70] sm:$0xff]
    %v526 = vld [vmem:[%s8 + $0x78] sm:$0xff]
    %vm527 = vcmask 64512
    %v529 = vsel %vm527, %v511, 0
    %v532 = vsel %vm527, %v512, 0
    %v535 = vsel %vm527, %v513, 0
    %v538 = vsel %vm527, %v514, 0
    %v541 = vsel %vm527, %v515, 0
    %v544 = vsel %vm527, %v516, 0
    %v547 = vsel %vm527, %v517, 0
    %v550 = vsel %vm527, %v518, 0
    %v553 = vsel %vm527, %v519, 0
    %v556 = vsel %vm527, %v520, 0
    %v559 = vsel %vm527, %v521, 0
    %v562 = vsel %vm527, %v522, 0
    %v565 = vsel %vm527, %v523, 0
    %v568 = vsel %vm527, %v524, 0
    %v571 = vsel %vm527, %v525, 0
    %v574 = vsel %vm527, %v526, 0
    %576 = vmatprep.subr.mxu0 0.0
    %577 = vmatpush1.msra.mxu0 %v510
    %578 = vmatprep.subr.mxu0 0.0
    %579 = vmatpush1.msra.mxu0 0.0
    %580 = vmatprep.subr.mxu0 0.0
    %581 = vmatpush1.msra.mxu0 0.0
    %582 = vmatprep.subr.mxu0 0.0
    %583 = vmatpush1.msra.mxu0 0.0
    %584 = vmatprep.subr.mxu0 0.0
    %585 = vmatpush1.msra.mxu0 0.0
    %586 = vmatprep.subr.mxu0 0.0
    %587 = vmatpush1.msra.mxu0 0.0
    %588 = vmatprep.subr.mxu0 0.0
    %589 = vmatpush1.msra.mxu0 0.0
    %590 = vmatprep.subr.mxu0 0.0
    %591 = vmatpush1.msra.mxu0 0.0
    %592 = vmatprep.subr.mxu0 0.0
    %593 = vmatpush1.msra.mxu0 0.0
    %594 = vmatprep.subr.mxu0 0.0
    %595 = vmatpush1.msra.mxu0 0.0
    %596 = vmatprep.subr.mxu0 0.0
    %597 = vmatpush1.msra.mxu0 0.0
    %598 = vmatprep.subr.mxu0 0.0
    %599 = vmatpush1.msra.mxu0 0.0
    %600 = vmatprep.subr.mxu0 0.0
    %601 = vmatpush1.msra.mxu0 0.0
    %602 = vmatprep.subr.mxu0 0.0
    %603 = vmatpush1.msra.mxu0 0.0
    %604 = vmatprep.subr.mxu0 0.0
    %605 = vmatpush1.msra.mxu0 0.0
    %606 = vmatprep.subr.mxu0 0.0
    %607 = vmatpush1.msra.mxu0 0.0
    %608 = vmatprep.subr.mxu0 0.0
    %609 = vmatpush1.msra.mxu0 0.0
    %610 = vmatprep.subr.mxu0 0.0
    %611 = vmatpush1.msra.mxu0 0.0
    %612 = vmatprep.subr.mxu0 0.0
    %613 = vmatpush1.msra.mxu0 0.0
    %614 = vmatprep.subr.mxu0 0.0
    %615 = vmatpush1.msra.mxu0 0.0
    %616 = vmatprep.subr.mxu0 0.0
    %617 = vmatpush1.msra.mxu0 0.0
    %618 = vmatprep.subr.mxu0 0.0
    %619 = vmatpush1.msra.mxu0 0.0
    %620 = vmatprep.subr.mxu0 0.0
    %621 = vmatpush1.msra.mxu0 0.0
    %622 = vmatprep.subr.mxu0 0.0
    %623 = vmatpush1.msra.mxu0 0.0
    %624 = vmatprep.subr.mxu0 0.0
    %625 = vmatpush1.msra.mxu0 0.0
    %626 = vmatprep.subr.mxu0 0.0
    %627 = vmatpush1.msra.mxu0 0.0
    %628 = vmatprep.subr.mxu0 0.0
    %629 = vmatpush1.msra.mxu0 0.0
    %630 = vmatprep.subr.mxu0 0.0
    %631 = vmatpush1.msra.mxu0 0.0
    %632 = vmatprep.subr.mxu0 0.0
    %633 = vmatpush1.msra.mxu0 0.0
    %634 = vmatprep.subr.mxu0 0.0
    %635 = vmatpush1.msra.mxu0 0.0
    %636 = vmatprep.subr.mxu0 0.0
    %637 = vmatpush1.msra.mxu0 0.0
    %638 = vmatprep.subr.mxu0 0.0
    %639 = vmatpush1.msra.mxu0 0.0
    %640 = vmatprep.mubr.f32.mxu0 0.0
    %641 = vmatmul.mubr.f32.gmra.mrb[0].mxu0 %v529
    %v642 = vpop.f32.mrb[0].mxu0
    %v643 = vadd.f32 0.0, %v642
    %v644 = vpop.f32.mrb[0].mxu0
    %645 = vmatprep.mubr.f32.mxu0 0.0
    %646 = vmatmul.mubr.f32.gmra.mrb[0].mxu0 %v532
    %v647 = vpop.f32.mrb[0].mxu0
    %v648 = vadd.f32 0.0, %v647
    %v649 = vpop.f32.mrb[0].mxu0
    %650 = vmatprep.mubr.f32.mxu0 0.0
    %651 = vmatmul.mubr.f32.gmra.mrb[0].mxu0 %v535
    %v652 = vpop.f32.mrb[0].mxu0
    %v653 = vadd.f32 0.0, %v652
    %v654 = vpop.f32.mrb[0].mxu0
    %655 = vmatprep.mubr.f32.mxu0 0.0
    %656 = vmatmul.mubr.f32.gmra.mrb[0].mxu0 %v538
    %v657 = vpop.f32.mrb[0].mxu0
    %v658 = vadd.f32 0.0, %v657
    %v659 = vpop.f32.mrb[0].mxu0
    %660 = vmatprep.mubr.f32.mxu0 0.0
    %661 = vmatmul.mubr.f32.gmra.mrb[0].mxu0 %v541
    %v662 = vpop.f32.mrb[0].mxu0
    %v663 = vadd.f32 0.0, %v662
    %v664 = vpop.f32.mrb[0].mxu0
    %665 = vmatprep.mubr.f32.mxu0 0.0
    %666 = vmatmul.mubr.f32.gmra.mrb[0].mxu0 %v544
    %v667 = vpop.f32.mrb[0].mxu0
    %v668 = vadd.f32 0.0, %v667
    %v669 = vpop.f32.mrb[0].mxu0
    %670 = vmatprep.mubr.f32.mxu0 0.0
    %671 = vmatmul.mubr.f32.gmra.mrb[0].mxu0 %v547
    %v672 = vpop.f32.mrb[0].mxu0
    %v673 = vadd.f32 0.0, %v672
    %v674 = vpop.f32.mrb[0].mxu0
    %675 = vmatprep.mubr.f32.mxu0 0.0
    %676 = vmatmul.mubr.f32.gmra.mrb[0].mxu0 %v550
    %v677 = vpop.f32.mrb[0].mxu0
    %v678 = vadd.f32 0.0, %v677
    %v679 = vpop.f32.mrb[0].mxu0
    %680 = vmatprep.mubr.f32.mxu0 0.0
    %681 = vmatmul.mubr.f32.gmra.mrb[0].mxu0 %v553
    %v682 = vpop.f32.mrb[0].mxu0
    %v683 = vadd.f32 0.0, %v682
    %v684 = vpop.f32.mrb[0].mxu0
    %685 = vmatprep.mubr.f32.mxu0 0.0
    %686 = vmatmul.mubr.f32.gmra.mrb[0].mxu0 %v556
    %v687 = vpop.f32.mrb[0].mxu0
    %v688 = vadd.f32 0.0, %v687
    %v689 = vpop.f32.mrb[0].mxu0
    %690 = vmatprep.mubr.f32.mxu0 0.0
    %691 = vmatmul.mubr.f32.gmra.mrb[0].mxu0 %v559
    %v692 = vpop.f32.mrb[0].mxu0
    %v693 = vadd.f32 0.0, %v692
    %v694 = vpop.f32.mrb[0].mxu0
    %695 = vmatprep.mubr.f32.mxu0 0.0
    %696 = vmatmul.mubr.f32.gmra.mrb[0].mxu0 %v562
    %v697 = vpop.f32.mrb[0].mxu0
    %v698 = vadd.f32 0.0, %v697
    %v699 = vpop.f32.mrb[0].mxu0
    %700 = vmatprep.mubr.f32.mxu0 0.0
    %701 = vmatmul.mubr.f32.gmra.mrb[0].mxu0 %v565
    %v702 = vpop.f32.mrb[0].mxu0
    %v703 = vadd.f32 0.0, %v702
    %v704 = vpop.f32.mrb[0].mxu0
    %705 = vmatprep.mubr.f32.mxu0 0.0
    %706 = vmatmul.mubr.f32.gmra.mrb[0].mxu0 %v568
    %v707 = vpop.f32.mrb[0].mxu0
    %v708 = vadd.f32 0.0, %v707
    %v709 = vpop.f32.mrb[0].mxu0
    %710 = vmatprep.mubr.f32.mxu0 0.0
    %711 = vmatmul.mubr.f32.gmra.mrb[0].mxu0 %v571
    %v712 = vpop.f32.mrb[0].mxu0
    %v713 = vadd.f32 0.0, %v712
    %v714 = vpop.f32.mrb[0].mxu0
    %715 = vmatprep.mubr.f32.mxu0 0.0
    %716 = vmatmul.mubr.f32.gmra.mrb[0].mxu0 %v574
    %v717 = vpop.f32.mrb[0].mxu0
    %v718 = vadd.f32 0.0, %v717
    %v719 = vpop.f32.mrb[0].mxu0
    %720 = vdwg.mxu0
    %v721 = vld [vmem:[%s9] sm:$0xff]
    %v722 = vld [vmem:[%s9 + $0x8] sm:$0xff]
    %v723 = vld [vmem:[%s9 + $0x10] sm:$0xff]
    %v724 = vld [vmem:[%s9 + $0x18] sm:$0xff]
    %v725 = vld [vmem:[%s9 + $0x20] sm:$0xff]
    %v726 = vld [vmem:[%s9 + $0x28] sm:$0xff]
    %v727 = vld [vmem:[%s9 + $0x30] sm:$0xff]
    %v728 = vld [vmem:[%s9 + $0x38] sm:$0xff]
    %v729 = vld [vmem:[%s9 + $0x40] sm:$0xff]
    %v730 = vld [vmem:[%s9 + $0x48] sm:$0xff]
    %v731 = vld [vmem:[%s9 + $0x50] sm:$0xff]
    %v732 = vld [vmem:[%s9 + $0x58] sm:$0xff]
    %v733 = vld [vmem:[%s9 + $0x60] sm:$0xff]
    %v734 = vld [vmem:[%s9 + $0x68] sm:$0xff]
    %v735 = vld [vmem:[%s9 + $0x70] sm:$0xff]
    %v736 = vld [vmem:[%s9 + $0x78] sm:$0xff]
    %v737 = vmul.f32 %v643, %v721
    %v738 = vmul.f32 %v648, %v722
    %v739 = vmul.f32 %v653, %v723
    %v740 = vmul.f32 %v658, %v724
    %v741 = vmul.f32 %v663, %v725
    %v742 = vmul.f32 %v668, %v726
    %v743 = vmul.f32 %v673, %v727
    %v744 = vmul.f32 %v678, %v728
    %v745 = vmul.f32 %v683, %v729
    %v746 = vmul.f32 %v688, %v730
    %v747 = vmul.f32 %v693, %v731
    %v748 = vmul.f32 %v698, %v732
    %v749 = vmul.f32 %v703, %v733
    %v750 = vmul.f32 %v708, %v734
    %v751 = vmul.f32 %v713, %v735
    %v752 = vmul.f32 %v718, %v736
    %v753 = vmul.f32 %v737, 1.442695
    %v754 = vpow.pop %v753
    %v755 = vmul.f32 %v738, 1.442695
    %v756 = vpow.pop %v755
    %v757 = vmul.f32 %v739, 1.442695
    %v758 = vpow.pop %v757
    %v759 = vmul.f32 %v740, 1.442695
    %v760 = vpow.pop %v759
    %v761 = vmul.f32 %v741, 1.442695
    %v762 = vpow.pop %v761
    %v763 = vmul.f32 %v742, 1.442695
    %v764 = vpow.pop %v763
    %v765 = vmul.f32 %v743, 1.442695
    %v766 = vpow.pop %v765
    %v767 = vmul.f32 %v744, 1.442695
    %v768 = vpow.pop %v767
    %v769 = vmul.f32 %v745, 1.442695
    %v770 = vpow.pop %v769
    %v771 = vmul.f32 %v746, 1.442695
    %v772 = vpow.pop %v771
    %v773 = vmul.f32 %v747, 1.442695
    %v774 = vpow.pop %v773
    %v775 = vmul.f32 %v748, 1.442695
    %v776 = vpow.pop %v775
    %v777 = vmul.f32 %v749, 1.442695
    %v778 = vpow.pop %v777
    %v779 = vmul.f32 %v750, 1.442695
    %v780 = vpow.pop %v779
    %v781 = vmul.f32 %v751, 1.442695
    %v782 = vpow.pop %v781
    %v783 = vmul.f32 %v752, 1.442695
    %v784 = vpow.pop %v783
    %v785 = vmul.f32 %v466, %v246
    %v786 = vmul.f32 %v467, %v247
    %788 = vset.pattern.permute.xlu0 0
    %789 = vperm.xlu0 %788, %v490
    %v790 = vpop.permute.xlu0 %789
    %793 = vset.pattern.permute.xlu0 0
    %794 = vperm.xlu0 %793, %v491
    %v795 = vpop.permute.xlu0 %794
    %v797 = vlaneseq
    %v798 = vshrl.u32 %v797, 7
    %v799 = vsub.s32 0, %v798
    %v800 = vrot.slane %v785, %v799
    %v801 = vmul.f32 %v790, %v800
    %v802 = vmul.f32 %v795, %v800
    %803 = vset.pattern.permute.xlu0 8
    %804 = vperm.xlu0 %803, %v490
    %v805 = vpop.permute.xlu0 %804
    %807 = vset.pattern.permute.xlu0 8
    %808 = vperm.xlu0 %807, %v491
    %v809 = vpop.permute.xlu0 %808
    %v811 = vlaneseq
    %v812 = vshrl.u32 %v811, 7
    %v813 = vsub.s32 0, %v812
    %v814 = vrot.slane %v786, %v813
    %v815 = vmul.f32 %v805, %v814
    %v816 = vmul.f32 %v809, %v814
    %819 = vrot.lane.b32.xlu0 %v815, 64
    %v820 = vpop.permute.xlu0 %819
    %821 = vrot.lane.b32.xlu0 %v816, 64
    %v822 = vpop.permute.xlu0 %821
    %v825 = vsel %vm256, %v801, %v820
    %v826 = vsel %vm256, %v802, %v822
    %828 = vset.pattern.permute.xlu0 0
    %829 = vperm.xlu0 %828, %v492
    %v830 = vpop.permute.xlu0 %829
    %833 = vset.pattern.permute.xlu0 0
    %834 = vperm.xlu0 %833, %v493
    %v835 = vpop.permute.xlu0 %834
    %837 = vset.pattern.permute.xlu0 8
    %838 = vperm.xlu0 %837, %v492
    %v839 = vpop.permute.xlu0 %838
    %841 = vset.pattern.permute.xlu0 8
    %842 = vperm.xlu0 %841, %v493
    %v843 = vpop.permute.xlu0 %842
    %v845 = vsel %vm256, %v830, %v839
    %v846 = vsel %vm256, %v835, %v843
    %v847 = vmul.f32 %v754, 0.0
    %v848 = vmul.f32 %v756, 0.0
    %v849 = vadd.f32 %v847, %v825
    %v850 = vadd.f32 %v848, %v826
    %v851 = vmul.f32 %v849, %v845
    %v852 = vmul.f32 %v850, %v846
    %v853 = vadd.f32 %v851, %v852
    %v854 = vrot.slane %v853, 4
    %v855 = vadd.f32 %v853, %v854
    %v856 = vrot.slane %v855, 2
    %v857 = vadd.f32 %v855, %v856
    %v858 = vrot.slane %v857, 1
    %v859 = vadd.f32 %v857, %v858
    %860 = vset.pattern.permute.xlu0 1
    %861 = vperm.xlu0 %860, %v490
    %v862 = vpop.permute.xlu0 %861
    %864 = vset.pattern.permute.xlu0 1
    %865 = vperm.xlu0 %864, %v491
    %v866 = vpop.permute.xlu0 %865
    %v868 = vlaneseq
    %v869 = vshrl.u32 %v868, 7
    %v870 = vsub.s32 1, %v869
    %v871 = vrot.slane %v785, %v870
    %v872 = vmul.f32 %v862, %v871
    %v873 = vmul.f32 %v866, %v871
    %874 = vset.pattern.permute.xlu0 9
    %875 = vperm.xlu0 %874, %v490
    %v876 = vpop.permute.xlu0 %875
    %878 = vset.pattern.permute.xlu0 9
    %879 = vperm.xlu0 %878, %v491
    %v880 = vpop.permute.xlu0 %879
    %v882 = vlaneseq
    %v883 = vshrl.u32 %v882, 7
    %v884 = vsub.s32 1, %v883
    %v885 = vrot.slane %v786, %v884
    %v886 = vmul.f32 %v876, %v885
    %v887 = vmul.f32 %v880, %v885
    %890 = vrot.lane.b32.xlu0 %v886, 64
    %v891 = vpop.permute.xlu0 %890
    %892 = vrot.lane.b32.xlu0 %v887, 64
    %v893 = vpop.permute.xlu0 %892
    %v896 = vsel %vm256, %v872, %v891
    %v897 = vsel %vm256, %v873, %v893
    %898 = vset.pattern.permute.xlu0 1
    %899 = vperm.xlu0 %898, %v492
    %v900 = vpop.permute.xlu0 %899
    %902 = vset.pattern.permute.xlu0 1
    %903 = vperm.xlu0 %902, %v493
    %v904 = vpop.permute.xlu0 %903
    %906 = vset.pattern.permute.xlu0 9
    %907 = vperm.xlu0 %906, %v492
    %v908 = vpop.permute.xlu0 %907
    %910 = vset.pattern.permute.xlu0 9
    %911 = vperm.xlu0 %910, %v493
    %v912 = vpop.permute.xlu0 %911
    %v914 = vsel %vm256, %v900, %v908
    %v915 = vsel %vm256, %v904, %v912
    %v916 = vmul.f32 %v758, %v849
    %v917 = vmul.f32 %v760, %v850
    %v918 = vadd.f32 %v916, %v896
    %v919 = vadd.f32 %v917, %v897
    %v920 = vmul.f32 %v918, %v914
    %v921 = vmul.f32 %v919, %v915
    %v922 = vadd.f32 %v920, %v921
    %v923 = vrot.slane %v922, 4
    %v924 = vadd.f32 %v922, %v923
    %v925 = vrot.slane %v924, 2
    %v926 = vadd.f32 %v924, %v925
    %v927 = vrot.slane %v926, 1
    %v928 = vadd.f32 %v926, %v927
    %929 = vset.pattern.permute.xlu0 2
    %930 = vperm.xlu0 %929, %v490
    %v931 = vpop.permute.xlu0 %930
    %933 = vset.pattern.permute.xlu0 2
    %934 = vperm.xlu0 %933, %v491
    %v935 = vpop.permute.xlu0 %934
    %v937 = vlaneseq
    %v938 = vshrl.u32 %v937, 7
    %v939 = vsub.s32 2, %v938
    %v940 = vrot.slane %v785, %v939
    %v941 = vmul.f32 %v931, %v940
    %v942 = vmul.f32 %v935, %v940
    %943 = vset.pattern.permute.xlu0 10
    %944 = vperm.xlu0 %943, %v490
    %v945 = vpop.permute.xlu0 %944
    %947 = vset.pattern.permute.xlu0 10
    %948 = vperm.xlu0 %947, %v491
    %v949 = vpop.permute.xlu0 %948
    %v951 = vlaneseq
    %v952 = vshrl.u32 %v951, 7
    %v953 = vsub.s32 2, %v952
    %v954 = vrot.slane %v786, %v953
    %v955 = vmul.f32 %v945, %v954
    %v956 = vmul.f32 %v949, %v954
    %959 = vrot.lane.b32.xlu0 %v955, 64
    %v960 = vpop.permute.xlu0 %959
    %961 = vrot.lane.b32.xlu0 %v956, 64
    %v962 = vpop.permute.xlu0 %961
    %v965 = vsel %vm256, %v941, %v960
    %v966 = vsel %vm256, %v942, %v962
    %967 = vset.pattern.permute.xlu0 2
    %968 = vperm.xlu0 %967, %v492
    %v969 = vpop.permute.xlu0 %968
    %971 = vset.pattern.permute.xlu0 2
    %972 = vperm.xlu0 %971, %v493
    %v973 = vpop.permute.xlu0 %972
    %975 = vset.pattern.permute.xlu0 10
    %976 = vperm.xlu0 %975, %v492
    %v977 = vpop.permute.xlu0 %976
    %979 = vset.pattern.permute.xlu0 10
    %980 = vperm.xlu0 %979, %v493
    %v981 = vpop.permute.xlu0 %980
    %v983 = vsel %vm256, %v969, %v977
    %v984 = vsel %vm256, %v973, %v981
    %v985 = vmul.f32 %v762, %v918
    %v986 = vmul.f32 %v764, %v919
    %v987 = vadd.f32 %v985, %v965
    %v988 = vadd.f32 %v986, %v966
    %v989 = vmul.f32 %v987, %v983
    %v990 = vmul.f32 %v988, %v984
    %v991 = vadd.f32 %v989, %v990
    %v992 = vrot.slane %v991, 4
    %v993 = vadd.f32 %v991, %v992
    %v994 = vrot.slane %v993, 2
    %v995 = vadd.f32 %v993, %v994
    %v996 = vrot.slane %v995, 1
    %v997 = vadd.f32 %v995, %v996
    %998 = vset.pattern.permute.xlu0 3
    %999 = vperm.xlu0 %998, %v490
    %v1000 = vpop.permute.xlu0 %999
    %1002 = vset.pattern.permute.xlu0 3
    %1003 = vperm.xlu0 %1002, %v491
    %v1004 = vpop.permute.xlu0 %1003
    %v1006 = vlaneseq
    %v1007 = vshrl.u32 %v1006, 7
    %v1008 = vsub.s32 3, %v1007
    %v1009 = vrot.slane %v785, %v1008
    %v1010 = vmul.f32 %v1000, %v1009
    %v1011 = vmul.f32 %v1004, %v1009
    %1012 = vset.pattern.permute.xlu0 11
    %1013 = vperm.xlu0 %1012, %v490
    %v1014 = vpop.permute.xlu0 %1013
    %1016 = vset.pattern.permute.xlu0 11
    %1017 = vperm.xlu0 %1016, %v491
    %v1018 = vpop.permute.xlu0 %1017
    %v1020 = vlaneseq
    %v1021 = vshrl.u32 %v1020, 7
    %v1022 = vsub.s32 3, %v1021
    %v1023 = vrot.slane %v786, %v1022
    %v1024 = vmul.f32 %v1014, %v1023
    %v1025 = vmul.f32 %v1018, %v1023
    %1028 = vrot.lane.b32.xlu0 %v1024, 64
    %v1029 = vpop.permute.xlu0 %1028
    %1030 = vrot.lane.b32.xlu0 %v1025, 64
    %v1031 = vpop.permute.xlu0 %1030
    %v1034 = vsel %vm256, %v1010, %v1029
    %v1035 = vsel %vm256, %v1011, %v1031
    %1036 = vset.pattern.permute.xlu0 3
    %1037 = vperm.xlu0 %1036, %v492
    %v1038 = vpop.permute.xlu0 %1037
    %1040 = vset.pattern.permute.xlu0 3
    %1041 = vperm.xlu0 %1040, %v493
    %v1042 = vpop.permute.xlu0 %1041
    %1044 = vset.pattern.permute.xlu0 11
    %1045 = vperm.xlu0 %1044, %v492
    %v1046 = vpop.permute.xlu0 %1045
    %1048 = vset.pattern.permute.xlu0 11
    %1049 = vperm.xlu0 %1048, %v493
    %v1050 = vpop.permute.xlu0 %1049
    %v1052 = vsel %vm256, %v1038, %v1046
    %v1053 = vsel %vm256, %v1042, %v1050
    %v1054 = vmul.f32 %v766, %v987
    %v1055 = vmul.f32 %v768, %v988
    %v1056 = vadd.f32 %v1054, %v1034
    %v1057 = vadd.f32 %v1055, %v1035
    %v1058 = vmul.f32 %v1056, %v1052
    %v1059 = vmul.f32 %v1057, %v1053
    %v1060 = vadd.f32 %v1058, %v1059
    %v1061 = vrot.slane %v1060, 4
    %v1062 = vadd.f32 %v1060, %v1061
    %v1063 = vrot.slane %v1062, 2
    %v1064 = vadd.f32 %v1062, %v1063
    %v1065 = vrot.slane %v1064, 1
    %v1066 = vadd.f32 %v1064, %v1065
    %1067 = vset.pattern.permute.xlu0 4
    %1068 = vperm.xlu0 %1067, %v490
    %v1069 = vpop.permute.xlu0 %1068
    %1071 = vset.pattern.permute.xlu0 4
    %1072 = vperm.xlu0 %1071, %v491
    %v1073 = vpop.permute.xlu0 %1072
    %v1075 = vlaneseq
    %v1076 = vshrl.u32 %v1075, 7
    %v1077 = vsub.s32 4, %v1076
    %v1078 = vrot.slane %v785, %v1077
    %v1079 = vmul.f32 %v1069, %v1078
    %v1080 = vmul.f32 %v1073, %v1078
    %1081 = vset.pattern.permute.xlu0 12
    %1082 = vperm.xlu0 %1081, %v490
    %v1083 = vpop.permute.xlu0 %1082
    %1085 = vset.pattern.permute.xlu0 12
    %1086 = vperm.xlu0 %1085, %v491
    %v1087 = vpop.permute.xlu0 %1086
    %v1089 = vlaneseq
    %v1090 = vshrl.u32 %v1089, 7
    %v1091 = vsub.s32 4, %v1090
    %v1092 = vrot.slane %v786, %v1091
    %v1093 = vmul.f32 %v1083, %v1092
    %v1094 = vmul.f32 %v1087, %v1092
    %1097 = vrot.lane.b32.xlu0 %v1093, 64
    %v1098 = vpop.permute.xlu0 %1097
    %1099 = vrot.lane.b32.xlu0 %v1094, 64
    %v1100 = vpop.permute.xlu0 %1099
    %v1103 = vsel %vm256, %v1079, %v1098
    %v1104 = vsel %vm256, %v1080, %v1100
    %1105 = vset.pattern.permute.xlu0 4
    %1106 = vperm.xlu0 %1105, %v492
    %v1107 = vpop.permute.xlu0 %1106
    %1109 = vset.pattern.permute.xlu0 4
    %1110 = vperm.xlu0 %1109, %v493
    %v1111 = vpop.permute.xlu0 %1110
    %1113 = vset.pattern.permute.xlu0 12
    %1114 = vperm.xlu0 %1113, %v492
    %v1115 = vpop.permute.xlu0 %1114
    %1117 = vset.pattern.permute.xlu0 12
    %1118 = vperm.xlu0 %1117, %v493
    %v1119 = vpop.permute.xlu0 %1118
    %v1121 = vsel %vm256, %v1107, %v1115
    %v1122 = vsel %vm256, %v1111, %v1119
    %v1123 = vmul.f32 %v770, %v1056
    %v1124 = vmul.f32 %v772, %v1057
    %v1125 = vadd.f32 %v1123, %v1103
    %v1126 = vadd.f32 %v1124, %v1104
    %v1127 = vmul.f32 %v1125, %v1121
    %v1128 = vmul.f32 %v1126, %v1122
    %v1129 = vadd.f32 %v1127, %v1128
    %v1130 = vrot.slane %v1129, 4
    %v1131 = vadd.f32 %v1129, %v1130
    %v1132 = vrot.slane %v1131, 2
    %v1133 = vadd.f32 %v1131, %v1132
    %v1134 = vrot.slane %v1133, 1
    %v1135 = vadd.f32 %v1133, %v1134
    %1136 = vset.pattern.permute.xlu0 5
    %1137 = vperm.xlu0 %1136, %v490
    %v1138 = vpop.permute.xlu0 %1137
    %1140 = vset.pattern.permute.xlu0 5
    %1141 = vperm.xlu0 %1140, %v491
    %v1142 = vpop.permute.xlu0 %1141
    %v1144 = vlaneseq
    %v1145 = vshrl.u32 %v1144, 7
    %v1146 = vsub.s32 5, %v1145
    %v1147 = vrot.slane %v785, %v1146
    %v1148 = vmul.f32 %v1138, %v1147
    %v1149 = vmul.f32 %v1142, %v1147
    %1150 = vset.pattern.permute.xlu0 13
    %1151 = vperm.xlu0 %1150, %v490
    %v1152 = vpop.permute.xlu0 %1151
    %1154 = vset.pattern.permute.xlu0 13
    %1155 = vperm.xlu0 %1154, %v491
    %v1156 = vpop.permute.xlu0 %1155
    %v1158 = vlaneseq
    %v1159 = vshrl.u32 %v1158, 7
    %v1160 = vsub.s32 5, %v1159
    %v1161 = vrot.slane %v786, %v1160
    %v1162 = vmul.f32 %v1152, %v1161
    %v1163 = vmul.f32 %v1156, %v1161
    %1166 = vrot.lane.b32.xlu0 %v1162, 64
    %v1167 = vpop.permute.xlu0 %1166
    %1168 = vrot.lane.b32.xlu0 %v1163, 64
    %v1169 = vpop.permute.xlu0 %1168
    %v1172 = vsel %vm256, %v1148, %v1167
    %v1173 = vsel %vm256, %v1149, %v1169
    %1174 = vset.pattern.permute.xlu0 5
    %1175 = vperm.xlu0 %1174, %v492
    %v1176 = vpop.permute.xlu0 %1175
    %1178 = vset.pattern.permute.xlu0 5
    %1179 = vperm.xlu0 %1178, %v493
    %v1180 = vpop.permute.xlu0 %1179
    %1182 = vset.pattern.permute.xlu0 13
    %1183 = vperm.xlu0 %1182, %v492
    %v1184 = vpop.permute.xlu0 %1183
    %1186 = vset.pattern.permute.xlu0 13
    %1187 = vperm.xlu0 %1186, %v493
    %v1188 = vpop.permute.xlu0 %1187
    %v1190 = vsel %vm256, %v1176, %v1184
    %v1191 = vsel %vm256, %v1180, %v1188
    %v1192 = vmul.f32 %v774, %v1125
    %v1193 = vmul.f32 %v776, %v1126
    %v1194 = vadd.f32 %v1192, %v1172
    %v1195 = vadd.f32 %v1193, %v1173
    %v1196 = vmul.f32 %v1194, %v1190
    %v1197 = vmul.f32 %v1195, %v1191
    %v1198 = vadd.f32 %v1196, %v1197
    %v1199 = vrot.slane %v1198, 4
    %v1200 = vadd.f32 %v1198, %v1199
    %v1201 = vrot.slane %v1200, 2
    %v1202 = vadd.f32 %v1200, %v1201
    %v1203 = vrot.slane %v1202, 1
    %v1204 = vadd.f32 %v1202, %v1203
    %1205 = vset.pattern.permute.xlu0 6
    %1206 = vperm.xlu0 %1205, %v490
    %v1207 = vpop.permute.xlu0 %1206
    %1209 = vset.pattern.permute.xlu0 6
    %1210 = vperm.xlu0 %1209, %v491
    %v1211 = vpop.permute.xlu0 %1210
    %v1213 = vlaneseq
    %v1214 = vshrl.u32 %v1213, 7
    %v1215 = vsub.s32 6, %v1214
    %v1216 = vrot.slane %v785, %v1215
    %v1217 = vmul.f32 %v1207, %v1216
    %v1218 = vmul.f32 %v1211, %v1216
    %1219 = vset.pattern.permute.xlu0 14
    %1220 = vperm.xlu0 %1219, %v490
    %v1221 = vpop.permute.xlu0 %1220
    %1223 = vset.pattern.permute.xlu0 14
    %1224 = vperm.xlu0 %1223, %v491
    %v1225 = vpop.permute.xlu0 %1224
    %v1227 = vlaneseq
    %v1228 = vshrl.u32 %v1227, 7
    %v1229 = vsub.s32 6, %v1228
    %v1230 = vrot.slane %v786, %v1229
    %v1231 = vmul.f32 %v1221, %v1230
    %v1232 = vmul.f32 %v1225, %v1230
    %1235 = vrot.lane.b32.xlu0 %v1231, 64
    %v1236 = vpop.permute.xlu0 %1235
    %1237 = vrot.lane.b32.xlu0 %v1232, 64
    %v1238 = vpop.permute.xlu0 %1237
    %v1241 = vsel %vm256, %v1217, %v1236
    %v1242 = vsel %vm256, %v1218, %v1238
    %1243 = vset.pattern.permute.xlu0 6
    %1244 = vperm.xlu0 %1243, %v492
    %v1245 = vpop.permute.xlu0 %1244
    %1247 = vset.pattern.permute.xlu0 6
    %1248 = vperm.xlu0 %1247, %v493
    %v1249 = vpop.permute.xlu0 %1248
    %1251 = vset.pattern.permute.xlu0 14
    %1252 = vperm.xlu0 %1251, %v492
    %v1253 = vpop.permute.xlu0 %1252
    %1255 = vset.pattern.permute.xlu0 14
    %1256 = vperm.xlu0 %1255, %v493
    %v1257 = vpop.permute.xlu0 %1256
    %v1259 = vsel %vm256, %v1245, %v1253
    %v1260 = vsel %vm256, %v1249, %v1257
    %v1261 = vmul.f32 %v778, %v1194
    %v1262 = vmul.f32 %v780, %v1195
    %v1263 = vadd.f32 %v1261, %v1241
    %v1264 = vadd.f32 %v1262, %v1242
    %v1265 = vmul.f32 %v1263, %v1259
    %v1266 = vmul.f32 %v1264, %v1260
    %v1267 = vadd.f32 %v1265, %v1266
    %v1268 = vrot.slane %v1267, 4
    %v1269 = vadd.f32 %v1267, %v1268
    %v1270 = vrot.slane %v1269, 2
    %v1271 = vadd.f32 %v1269, %v1270
    %v1272 = vrot.slane %v1271, 1
    %v1273 = vadd.f32 %v1271, %v1272
    %1274 = vset.pattern.permute.xlu0 7
    %1275 = vperm.xlu0 %1274, %v490
    %v1276 = vpop.permute.xlu0 %1275
    %1278 = vset.pattern.permute.xlu0 7
    %1279 = vperm.xlu0 %1278, %v491
    %v1280 = vpop.permute.xlu0 %1279
    %v1282 = vlaneseq
    %v1283 = vshrl.u32 %v1282, 7
    %v1284 = vsub.s32 7, %v1283
    %v1285 = vrot.slane %v785, %v1284
    %v1286 = vmul.f32 %v1276, %v1285
    %v1287 = vmul.f32 %v1280, %v1285
    %1288 = vset.pattern.permute.xlu0 15
    %1289 = vperm.xlu0 %1288, %v490
    %v1290 = vpop.permute.xlu0 %1289
    %1292 = vset.pattern.permute.xlu0 15
    %1293 = vperm.xlu0 %1292, %v491
    %v1294 = vpop.permute.xlu0 %1293
    %v1296 = vlaneseq
    %v1297 = vshrl.u32 %v1296, 7
    %v1298 = vsub.s32 7, %v1297
    %v1299 = vrot.slane %v786, %v1298
    %v1300 = vmul.f32 %v1290, %v1299
    %v1301 = vmul.f32 %v1294, %v1299
    %1304 = vrot.lane.b32.xlu0 %v1300, 64
    %v1305 = vpop.permute.xlu0 %1304
    %1306 = vrot.lane.b32.xlu0 %v1301, 64
    %v1307 = vpop.permute.xlu0 %1306
    %v1310 = vsel %vm256, %v1286, %v1305
    %v1311 = vsel %vm256, %v1287, %v1307
    %1312 = vset.pattern.permute.xlu0 7
    %1313 = vperm.xlu0 %1312, %v492
    %v1314 = vpop.permute.xlu0 %1313
    %1316 = vset.pattern.permute.xlu0 7
    %1317 = vperm.xlu0 %1316, %v493
    %v1318 = vpop.permute.xlu0 %1317
    %1320 = vset.pattern.permute.xlu0 15
    %1321 = vperm.xlu0 %1320, %v492
    %v1322 = vpop.permute.xlu0 %1321
    %1324 = vset.pattern.permute.xlu0 15
    %1325 = vperm.xlu0 %1324, %v493
    %v1326 = vpop.permute.xlu0 %1325
    %v1328 = vsel %vm256, %v1314, %v1322
    %v1329 = vsel %vm256, %v1318, %v1326
    %v1330 = vmul.f32 %v782, %v1263
    %v1331 = vmul.f32 %v784, %v1264
    %v1332 = vadd.f32 %v1330, %v1310
    %v1333 = vadd.f32 %v1331, %v1311
    %v1334 = vmul.f32 %v1332, %v1328
    %v1335 = vmul.f32 %v1333, %v1329
    %v1336 = vadd.f32 %v1334, %v1335
    %v1337 = vrot.slane %v1336, 4
    %v1338 = vadd.f32 %v1336, %v1337
    %v1339 = vrot.slane %v1338, 2
    %v1340 = vadd.f32 %v1338, %v1339
    %v1341 = vrot.slane %v1340, 1
    %v1342 = vadd.f32 %v1340, %v1341
    %vm1343 = vcmask 1040384
    %v1344 = vsel %vm1343, %v859, %v928
    %vm1345 = vcmask 1041408
    %v1346 = vsel %vm1345, %v1344, %v997
    %vm1347 = vcmask 1042432
    %v1348 = vsel %vm1347, %v1346, %v1066
    %v1349 = vsel %vm353, %v1348, %v1135
    %vm1350 = vcmask 1044480
    %v1351 = vsel %vm1350, %v1349, %v1204
    %vm1352 = vcmask 1045504
    %v1353 = vsel %vm1352, %v1351, %v1273
    %vm1354 = vcmask 1046528
    %v1355 = vsel %vm1354, %v1353, %v1342
    %1357 = vrot.lane.b32.xlu0 %v1355, 64
    %v1358 = vpop.permute.xlu0 %1357
    %v1360 = vld [vmem:[%s10] sm:$0x1]
    %v1362 = vlaneseq
    %v1363 = vshrl.u32 %v1362, 7
    %v1364 = vsub.s32 0, %v1363
    %v1365 = vrot.slane %v1360, %v1364
    %v1367 = vmul.f32 %v246, %v1365
    %v1368 = vmul.f32 %v247, %v1365
    %v1369 = vadd.f32 %v1355, %v1367
    %v1370 = vadd.f32 %v1358, %v1368
    %v1371 = vxor.u32 %v124, 2147483648
    %v1372 = vxor.u32 %v129, 2147483648
    %v1373 = vmul.f32 %v1371, 1.442695
    %v1374 = vpow.pop %v1373
    %v1375 = vmul.f32 %v1372, 1.442695
    %v1376 = vpow.pop %v1375
    %v1377 = vadd.f32 %v1374, 1.0
    %v1378 = vadd.f32 %v1376, 1.0
    %v1379 = vrcp.pop %v1377
    %v1380 = vmul.f32 1.0, %v1379
    %v1381 = vrcp.pop %v1378
    %v1382 = vmul.f32 1.0, %v1381
    %v1383 = vmul.f32 %v124, %v1380
    %v1384 = vmul.f32 %v129, %v1382
    %1387 = vrot.lane.b32.xlu0 %v1383, 64
    %v1388 = vpop.permute.xlu0 %1387
    %1389 = vrot.lane.b32.xlu0 %v1384, 64
    %v1390 = vpop.permute.xlu0 %1389
    %v1393 = vmul.f32 %v1369, %v1388
    %v1394 = vmul.f32 %v1370, %v1390
    %v1395 = vld [vmem:[%s11] sm:$0xff]
    %v1396 = vld [vmem:[%s11 + $0x8] sm:$0xff]
    %v1397 = vld [vmem:[%s11 + $0x10] sm:$0xff]
    %v1398 = vld [vmem:[%s11 + $0x18] sm:$0xff]
    %v1399 = vld [vmem:[%s11 + $0x20] sm:$0xff]
    %v1400 = vld [vmem:[%s11 + $0x28] sm:$0xff]
    %v1401 = vld [vmem:[%s11 + $0x30] sm:$0xff]
    %v1402 = vld [vmem:[%s11 + $0x38] sm:$0xff]
    %v1404 = vsel %vm256, %v1393, 0
    %v1407 = vsel %vm256, %v1394, 0
    %1409 = vmatprep.subr.mxu0 0.0
    %1410 = vmatpush1.msra.mxu0 %v1395
    %1411 = vmatprep.subr.mxu0 0.0
    %1412 = vmatpush1.msra.mxu0 %v1396
    %1413 = vmatprep.subr.mxu0 0.0
    %1414 = vmatpush1.msra.mxu0 %v1397
    %1415 = vmatprep.subr.mxu0 0.0
    %1416 = vmatpush1.msra.mxu0 %v1398
    %1417 = vmatprep.subr.mxu0 0.0
    %1418 = vmatpush1.msra.mxu0 %v1399
    %1419 = vmatprep.subr.mxu0 0.0
    %1420 = vmatpush1.msra.mxu0 %v1400
    %1421 = vmatprep.subr.mxu0 0.0
    %1422 = vmatpush1.msra.mxu0 %v1401
    %1423 = vmatprep.subr.mxu0 0.0
    %1424 = vmatpush1.msra.mxu0 %v1402
    %1425 = vmatprep.subr.mxu0 0.0
    %1426 = vmatpush1.msra.mxu0 0.0
    %1427 = vmatprep.subr.mxu0 0.0
    %1428 = vmatpush1.msra.mxu0 0.0
    %1429 = vmatprep.subr.mxu0 0.0
    %1430 = vmatpush1.msra.mxu0 0.0
    %1431 = vmatprep.subr.mxu0 0.0
    %1432 = vmatpush1.msra.mxu0 0.0
    %1433 = vmatprep.subr.mxu0 0.0
    %1434 = vmatpush1.msra.mxu0 0.0
    %1435 = vmatprep.subr.mxu0 0.0
    %1436 = vmatpush1.msra.mxu0 0.0
    %1437 = vmatprep.subr.mxu0 0.0
    %1438 = vmatpush1.msra.mxu0 0.0
    %1439 = vmatprep.subr.mxu0 0.0
    %1440 = vmatpush1.msra.mxu0 0.0
    %1441 = vmatprep.subr.mxu0 0.0
    %1442 = vmatpush1.msra.mxu0 0.0
    %1443 = vmatprep.subr.mxu0 0.0
    %1444 = vmatpush1.msra.mxu0 0.0
    %1445 = vmatprep.subr.mxu0 0.0
    %1446 = vmatpush1.msra.mxu0 0.0
    %1447 = vmatprep.subr.mxu0 0.0
    %1448 = vmatpush1.msra.mxu0 0.0
    %1449 = vmatprep.subr.mxu0 0.0
    %1450 = vmatpush1.msra.mxu0 0.0
    %1451 = vmatprep.subr.mxu0 0.0
    %1452 = vmatpush1.msra.mxu0 0.0
    %1453 = vmatprep.subr.mxu0 0.0
    %1454 = vmatpush1.msra.mxu0 0.0
    %1455 = vmatprep.subr.mxu0 0.0
    %1456 = vmatpush1.msra.mxu0 0.0
    %1457 = vmatprep.subr.mxu0 0.0
    %1458 = vmatpush1.msra.mxu0 0.0
    %1459 = vmatprep.subr.mxu0 0.0
    %1460 = vmatpush1.msra.mxu0 0.0
    %1461 = vmatprep.subr.mxu0 0.0
    %1462 = vmatpush1.msra.mxu0 0.0
    %1463 = vmatprep.subr.mxu0 0.0
    %1464 = vmatpush1.msra.mxu0 0.0
    %1465 = vmatprep.subr.mxu0 0.0
    %1466 = vmatpush1.msra.mxu0 0.0
    %1467 = vmatprep.subr.mxu0 0.0
    %1468 = vmatpush1.msra.mxu0 0.0
    %1469 = vmatprep.subr.mxu0 0.0
    %1470 = vmatpush1.msra.mxu0 0.0
    %1471 = vmatprep.subr.mxu0 0.0
    %1472 = vmatpush1.msra.mxu0 0.0
    %1473 = vmatprep.mubr.f32.mxu0 0.0
    %1474 = vmatmul.mubr.f32.gmra.mrb[0].mxu0 %v1404
    %v1475 = vpop.f32.mrb[0].mxu0
    %v1476 = vadd.f32 0.0, %v1475
    %v1477 = vpop.f32.mrb[0].mxu0
    %1478 = vmatprep.mubr.f32.mxu0 0.0
    %1479 = vmatmul.mubr.f32.gmra.mrb[0].mxu0 %v1407
    %v1480 = vpop.f32.mrb[0].mxu0
    %v1481 = vadd.f32 0.0, %v1480
    %v1482 = vpop.f32.mrb[0].mxu0
    %1483 = vdwg.mxu0
    %v1485 = vrot.slane %v1476, 1
    %1486 = vrot.lane.b32.xlu0 %v1485, 32
    %v1487 = vpop.permute.xlu0 %1486
    %v1489 = vrot.slane %v1476, 2
    %1490 = vrot.lane.b32.xlu0 %v1489, 64
    %v1491 = vpop.permute.xlu0 %1490
    %v1493 = vrot.slane %v1476, 3
    %1494 = vrot.lane.b32.xlu0 %v1493, 96
    %v1495 = vpop.permute.xlu0 %1494
    %v1497 = vrot.slane %v1476, 4
    %v1499 = vrot.slane %v1476, 5
    %1500 = vrot.lane.b32.xlu0 %v1499, 32
    %v1501 = vpop.permute.xlu0 %1500
    %v1503 = vrot.slane %v1476, 6
    %1504 = vrot.lane.b32.xlu0 %v1503, 64
    %v1505 = vpop.permute.xlu0 %1504
    %v1507 = vrot.slane %v1476, 7
    %1508 = vrot.lane.b32.xlu0 %v1507, 96
    %v1509 = vpop.permute.xlu0 %1508
    %v1511 = vsel %vm50, %v1476, %v1487
    %v1512 = vsel %vm256, %v1511, %v1491
    %vm1513 = vcmask 785408
    %v1514 = vsel %vm1513, %v1512, %v1495
    %v1515 = vsel %vm50, %v1497, %v1501
    %v1516 = vsel %vm256, %v1515, %v1505
    %v1517 = vsel %vm1513, %v1516, %v1509
    %v1519 = vrot.slane %v1481, 1
    %1520 = vrot.lane.b32.xlu0 %v1519, 32
    %v1521 = vpop.permute.xlu0 %1520
    %v1523 = vrot.slane %v1481, 2
    %1524 = vrot.lane.b32.xlu0 %v1523, 64
    %v1525 = vpop.permute.xlu0 %1524
    %v1527 = vrot.slane %v1481, 3
    %1528 = vrot.lane.b32.xlu0 %v1527, 96
    %v1529 = vpop.permute.xlu0 %1528
    %v1531 = vrot.slane %v1481, 4
    %v1533 = vrot.slane %v1481, 5
    %1534 = vrot.lane.b32.xlu0 %v1533, 32
    %v1535 = vpop.permute.xlu0 %1534
    %v1537 = vrot.slane %v1481, 6
    %1538 = vrot.lane.b32.xlu0 %v1537, 64
    %v1539 = vpop.permute.xlu0 %1538
    %v1541 = vrot.slane %v1481, 7
    %1542 = vrot.lane.b32.xlu0 %v1541, 96
    %v1543 = vpop.permute.xlu0 %1542
    %v1545 = vsel %vm50, %v1481, %v1521
    %v1546 = vsel %vm256, %v1545, %v1525
    %v1547 = vsel %vm1513, %v1546, %v1529
    %v1548 = vsel %vm50, %v1531, %v1535
    %v1549 = vsel %vm256, %v1548, %v1539
    %v1550 = vsel %vm1513, %v1549, %v1543
    %v1553 = vrot.slane %v1547, 7
    %v1554 = vrot.slane %v1550, 7
    %v1557 = vsel %vm1343, %v1514, %v1553
    %v1558 = vsel %vm1343, %v1517, %v1554
    %v1561 = vcombine.low %v1557, %v1558
    %v1563 = vunpack.c.l.s4 1983009808
    %v1564 = vunpack.c.0.s8 %v1563
    %v1565 = vlaneseq
    %v1566 = vshrl.u32 %v1565, 7
    %v1567 = vsub.s32 %v1564, %v1566
    %v1568 = vrot.slane %v1561, %v1567
    %1570 = vst [vmem:[#allocation2] sm:$0xf] %v1568
    // Predicated region
    $region50: #{tpu_custom_call.1} parent=1 // pred_check
      _
    $region51: #{tpu_custom_call.1} parent=1 // pred_check_branch
      %1572 = sbr.rel (0) target = $region53
    $region52: #{tpu_custom_call.1} parent=1 // pred_region
      %s1574 = ssub.s32 64, 64
      %1575 = vsyncadd [#allocation3], %s1574
      %s1577 = sshll.u32 [#allocation2], 4
      %s1578 = int_to_ptr.vmem [resolvable:$true] %s1577
      %1580 = dma.vmem_to_hbm [thread:$0]  %s1578, 64, %s12, [#allocation3]
    $region53: #{tpu_custom_call.1} parent=1 // pred_fallthru
      _
    // Predicated region
    $region54: #{tpu_custom_call.1} parent=1 // pred_check
      _
    $region55: #{tpu_custom_call.1} parent=1 // pred_check_branch
      %1582 = sbr.rel (0) target = $region57
    $region56: #{tpu_custom_call.1} parent=1 // pred_region
      %1583 = dma.done [#allocation3], 64
    $region57: #{tpu_custom_call.1} parent=1 // pred_fallthru
      _
    %1584 = vsyncpa [#allocation3], 1

</llo_original>
